<compile_context>
chip_gen: v5e
topology: v5e:2x2
jax: 0.10.0
libtpu: 0.0.40
codegen_flags: <defaults>
</compile_context>

<pallas_src>
import jax
import jax.numpy as jnp
from jax import lax
from jax.experimental import pallas as pl
from jax.experimental.pallas import tpu as pltpu


# ----------------------------------------------------------------------------
# Small helpers
# ----------------------------------------------------------------------------
def _round_up(x, m):
    return ((x + m - 1) // m) * m


def _pick_row_tile(n, cap=512):
    """Largest multiple-of-16 tile <= cap that divides n (n is a multiple of 16)."""
    t = (min(cap, n) // 16) * 16
    while t > 16 and n % t != 0:
        t -= 16
    return t


def _scoped_vmem_bytes():
    """Generation-aware scoped-VMEM budget (v5e/v6e: 128 MiB, v7x: 64 MiB)."""
    cap = None
    try:
        info = pltpu.get_tpu_info()
        for name in ("vmem_capacity_bytes", "vmem_size_bytes", "vmem_bytes"):
            if hasattr(info, name):
                cap = int(getattr(info, name))
                break
    except Exception:
        cap = None
    if not cap:
        return 48 * 1024 * 1024                      # safe on every generation
    return max(32 * 1024 * 1024, min(96 * 1024 * 1024, (cap * 3) // 4))


# ----------------------------------------------------------------------------
# Pallas kernels
# ----------------------------------------------------------------------------
def _make_lstm_kernel(T_real, Tc, tB, Hp):
    """One LSTM layer.  Grid = (batch blocks, time chunks)."""

    def kernel(x_ref, h0_ref, c0_ref, wih_ref, whh_ref, b_ref,
               y_ref, hT_ref, cT_ref, h_scr, c_scr, gx_scr):
        chunk = pl.program_id(1)

        @pl.when(chunk == 0)
        def _():
            h_scr[...] = h0_ref[...]
            c_scr[...] = c0_ref[...]

        # ---- hoisted input projection for the whole time chunk: one big MXU
        #      matmul (Tc*tB, Hp) x (Hp, 4Hp) with fused bias, f32 accumulation.
        #      x is already bf16; gate buffer stays 2-D (no relayout).
        x2d = x_ref[...].reshape(Tc * tB, Hp)
        gx_scr[...] = lax.dot_general(
            x2d, wih_ref[...], (((1,), (1,)), ((), ())),
            preferred_element_type=jnp.float32) + b_ref[...]

        # Real (unpadded) timesteps in this chunk: padding handled by the loop
        # bound, so the serial recurrence carries no per-step selects.
        n_valid = jnp.minimum(Tc, T_real - chunk * Tc)

        # ---- sequential recurrence: only the small h @ W_hh^T matmul per step.
        def step(t, carry):
            h = h_scr[...]
            row = pl.multiple_of(t * tB, tB)
            gates = gx_scr[pl.ds(row, tB), :] + lax.dot_general(
                h.astype(jnp.bfloat16), whh_ref[...], (((1,), (1,)), ((), ())),
                preferred_element_type=jnp.float32)            # (tB, 4Hp) f32
            i_g = jax.nn.sigmoid(gates[:, 0 * Hp:1 * Hp])
            f_g = jax.nn.sigmoid(gates[:, 1 * Hp:2 * Hp])
            g_g = jnp.tanh(gates[:, 2 * Hp:3 * Hp])
            o_g = jax.nn.sigmoid(gates[:, 3 * Hp:4 * Hp])
            c_new = f_g * c_scr[...] + i_g * g_g
            h_new = o_g * jnp.tanh(c_new)
            h_scr[...] = h_new
            c_scr[...] = c_new
            y_ref[t] = h_new.astype(jnp.bfloat16)
            return carry

        lax.fori_loop(0, n_valid, step, 0)

        # Fill padded tail timesteps (only ever non-empty on the last chunk) so
        # the y output block is fully written / deterministic.
        h_last_bf16 = h_scr[...].astype(jnp.bfloat16)

        def pad_fill(t, carry):
            y_ref[t] = h_last_bf16
            return carry

        lax.fori_loop(n_valid, Tc, pad_fill, 0)

        # Final-state writes only on the last chunk (no per-step dead stores).
        @pl.when(chunk == pl.num_programs(1) - 1)
        def _():
            hT_ref[...] = h_scr[...]
            cT_ref[...] = c_scr[...]

    return kernel


def _make_decoder_kernel(V_real, tV):
    """Tied decoder projection + per-row CE via online logsumexp over V tiles."""

    def kernel(feat_ref, w_ref, b_ref, tgt_ref, out_ref, m_scr, l_scr, t_scr):
        j = pl.program_id(1)

        @pl.when(j == 0)
        def _():
            m_scr[...] = jnp.full_like(m_scr, -3.0e38)
            l_scr[...] = jnp.zeros_like(l_scr)
            t_scr[...] = jnp.zeros_like(t_scr)

        logits = lax.dot_general(
            feat_ref[...], w_ref[...], (((1,), (1,)), ((), ())),
            preferred_element_type=jnp.float32) + b_ref[...]  # (tN, tV)

        col = lax.broadcasted_iota(jnp.int32, logits.shape, 1) + j * tV
        valid = col < V_real
        s = jnp.where(valid, logits, -3.0e38)                 # mask padded vocab

        m_prev = m_scr[...]
        m_new = jnp.maximum(m_prev, jnp.max(s, axis=-1, keepdims=True))
        alpha = jnp.exp(m_prev - m_new)
        p = jnp.exp(s - m_new)
        l_scr[...] = alpha * l_scr[...] + jnp.sum(p, axis=-1, keepdims=True)

        # Target logit via iota==target compare (no one-hot materialization).
        is_t = (col == tgt_ref[...]) & valid
        t_scr[...] = t_scr[...] + jnp.sum(jnp.where(is_t, logits, 0.0),
                                          axis=-1, keepdims=True)
        m_scr[...] = m_new

        @pl.when(j == pl.num_programs(1) - 1)
        def _():
            out_ref[...] = (m_scr[...] + jnp.log(l_scr[...])) - t_scr[...]

    return kernel


# ----------------------------------------------------------------------------
# pallas_call wrappers
# ----------------------------------------------------------------------------
def lstm_layer_pallas(x, h0, c0, w_ih, w_hh, b, *, T_real, Tc, tB, vmem_limit):
    T_pad, B_pad, Hp = x.shape
    nb, nc = B_pad // tB, T_pad // Tc
    kernel = _make_lstm_kernel(T_real, Tc, tB, Hp)
    const = pl.Buffered(1)     # single-buffer blocks whose index never changes

    grid_spec = pltpu.PrefetchScalarGridSpec(
        num_scalar_prefetch=0,
        grid=(nb, nc),
        in_specs=[
            pl.BlockSpec((Tc, tB, Hp), lambda bb, c: (c, bb, 0)),   # x chunk bf16
            pl.BlockSpec((tB, Hp), lambda bb, c: (bb, 0)),          # h0
            pl.BlockSpec((tB, Hp), lambda bb, c: (bb, 0)),          # c0
            pl.BlockSpec((4 * Hp, Hp), lambda bb, c: (0, 0),
                         pipeline_mode=const),                      # W_ih (bf16)
            pl.BlockSpec((4 * Hp, Hp), lambda bb, c: (0, 0),
                         pipeline_mode=const),                      # W_hh (bf16)
            pl.BlockSpec((1, 4 * Hp), lambda bb, c: (0, 0),
                         pipeline_mode=const),                      # fused bias
        ],
        out_specs=[
            pl.BlockSpec((Tc, tB, Hp), lambda bb, c: (c, bb, 0)),   # y chunk bf16
            pl.BlockSpec((tB, Hp), lambda bb, c: (bb, 0)),          # h_T (f32)
            pl.BlockSpec((tB, Hp), lambda bb, c: (bb, 0)),          # c_T (f32)
        ],
        scratch_shapes=[
            pltpu.VMEM((tB, Hp), jnp.float32),                      # h state
            pltpu.VMEM((tB, Hp), jnp.float32),                      # c state
            pltpu.VMEM((Tc * tB, 4 * Hp), jnp.float32),             # gates_x
        ],
    )
    y, hT, cT = pl.pallas_call(
        kernel,
        out_shape=(jax.ShapeDtypeStruct((T_pad, B_pad, Hp), jnp.bfloat16),
                   jax.ShapeDtypeStruct((B_pad, Hp), jnp.float32),
                   jax.ShapeDtypeStruct((B_pad, Hp), jnp.float32)),
        grid_spec=grid_spec,
        compiler_params=pltpu.CompilerParams(
            dimension_semantics=("parallel", "arbitrary"),
            vmem_limit_bytes=vmem_limit),
    )(x, h0, c0, w_ih, w_hh, b)
    return y, hT, cT


def decoder_ce_pallas(feats, dec_w, dec_b, targets_col, V_real, *, tN, tV,
                      vmem_limit):
    N_pad, Hp = feats.shape
    Vp = dec_w.shape[0]
    ni, nj = N_pad // tN, Vp // tV
    kernel = _make_decoder_kernel(V_real, tV)

    rowloss = pl.pallas_call(
        kernel,
        out_shape=jax.ShapeDtypeStruct((N_pad, 1), jnp.float32),
        grid_spec=pltpu.PrefetchScalarGridSpec(
            num_scalar_prefetch=0,
            grid=(ni, nj),
            in_specs=[
                pl.BlockSpec((tN, Hp), lambda i, j: (i, 0)),        # feats (bf16)
                pl.BlockSpec((tV, Hp), lambda i, j: (j, 0)),        # tied W (bf16)
                pl.BlockSpec((1, tV), lambda i, j: (0, j)),         # bias
                pl.BlockSpec((tN, 1), lambda i, j: (i, 0)),         # int targets
            ],
            out_specs=pl.BlockSpec((tN, 1), lambda i, j: (i, 0)),   # per-row loss
            scratch_shapes=[
                pltpu.VMEM((tN, 1), jnp.float32),                   # running max
                pltpu.VMEM((tN, 1), jnp.float32),                   # running sum
                pltpu.VMEM((tN, 1), jnp.float32),                   # target logit
            ],
        ),
        compiler_params=pltpu.CompilerParams(
            dimension_semantics=("parallel", "arbitrary"),
            vmem_limit_bytes=vmem_limit),
        cost_estimate=pl.CostEstimate(
            flops=2 * N_pad * Hp * Vp,
            transcendentals=N_pad * Vp,
            bytes_accessed=N_pad * Hp * 2 * nj + Vp * Hp * 2 * ni + N_pad * 8),
    )(feats, dec_w, dec_b, targets_col)
    return rowloss


# ----------------------------------------------------------------------------
# One-time parameter preparation (padding + bf16 cast; NOT per-forward work)
# ----------------------------------------------------------------------------
def prepare_kernel_params(params):
    emb = params["embedding"]
    V, H = emb.shape
    Hp = _round_up(H, 128)
    L = len(params["lstm"])
    tV = min(1024, _round_up(V, 128))
    Vp = _round_up(V, tV)

    # Activation stream (embeddings, inter-layer x/y, decoder feats) is bf16.
    emb_p = (jnp.zeros((V, Hp), jnp.float32).at[:, :H].set(emb)
             .astype(jnp.bfloat16))

    w_ih_l, w_hh_l, b_l = [], [], []
    for (w_ih, w_hh, b_ih, b_hh) in params["lstm"]:
        def pad_w(w):
            w4 = w.reshape(4, H, H)
            wp = jnp.zeros((4, Hp, Hp), jnp.float32).at[:, :H, :H].set(w4)
            return wp.reshape(4 * Hp, Hp).astype(jnp.bfloat16)
        w_ih_l.append(pad_w(w_ih))
        w_hh_l.append(pad_w(w_hh))
        b4 = (b_ih + b_hh).reshape(4, H)
        b_l.append(jnp.zeros((4, Hp), jnp.float32).at[:, :H].set(b4)
                   .reshape(1, 4 * Hp))

    dec_w = (jnp.zeros((Vp, Hp), jnp.float32)
             .at[:V, :H].set(params["decoder_w"]).astype(jnp.bfloat16))
    dec_b = jnp.zeros((1, Vp), jnp.float32).at[0, :V].set(params["decoder_b"])

    return dict(embedding_p=emb_p, w_ih=w_ih_l, w_hh=w_hh_l, b=b_l,
                dec_w=dec_w, dec_b=dec_b,
                H=H, Hp=Hp, V=V, Vp=Vp, L=L, tV=tV)


# ----------------------------------------------------------------------------
# Full model forward (mirrors LSTMLanguageModelWrapper.forward, eval mode)
# ----------------------------------------------------------------------------
def lstm_lm_wrapper_forward(kp, indices, targets, state=None):
    """indices, targets: (B, T) int32.  Returns (scalar loss, (h, c))."""
    B, T = indices.shape
    H, Hp, V, L = kp["H"], kp["Hp"], kp["V"], kp["L"]
    vmem_limit = _scoped_vmem_bytes()

    # Batch tile: multiple of 16 (bf16 sublane packing), up to 64 sublanes of
    # MXU fill per recurrent matmul; prefer >=2 batch blocks when B allows so
    # both TensorCores of a v7x chip get work on the parallel axis.
    tB = min(64, _round_up(B, 16))
    if tB == 64 and 32 < B <= 64:
        tB = 32
    B_pad = _round_up(B, tB)

    # Time chunk sized so the x/y double-buffers (bf16) + f32 gate scratch fit
    # the per-generation VMEM budget next to the single-buffered weights.
    per_tc = 24 * tB * Hp                         # bytes of VMEM per unit of Tc
    w_bytes = 2 * (4 * Hp) * Hp * 2               # bf16 W_ih + W_hh (Buffered(1))
    tc_cap = max(1, (vmem_limit // 2 - w_bytes) // per_tc)
    Tc = max(1, min(32, T, tc_cap))
    T_pad = _round_up(T, Tc)

    if state is None:
        h_state = jnp.zeros((L, B, H), jnp.float32)
        c_state = jnp.zeros((L, B, H), jnp.float32)
    else:
        h_state, c_state = state

    # Glue: gather the bf16 embedding straight into padded, time-major layout
    # (only the tiny int32 index matrix is padded/transposed; no extra pass over
    # the activation stream).  TODO(synk): gather stays in plain JAX.
    idx_tm = jnp.zeros((T_pad, B_pad), jnp.int32).at[:T, :B].set(indices.T)
    x = jnp.take(kp["embedding_p"], idx_tm, axis=0)       # (T_pad, B_pad, Hp) bf16

    new_h, new_c = [], []
    for l in range(L):
        h0 = jnp.pad(h_state[l], ((0, B_pad - B), (0, Hp - H)))
        c0 = jnp.pad(c_state[l], ((0, B_pad - B), (0, Hp - H)))
        x, hT, cT = lstm_layer_pallas(x, h0, c0, kp["w_ih"][l], kp["w_hh"][l],
                                      kp["b"][l], T_real=T, Tc=Tc, tB=tB,
                                      vmem_limit=vmem_limit)
        new_h.append(hT[:B, :H])
        new_c.append(cT[:B, :H])

    # Decoder + mean CE, consumed time-major (mean CE is permutation invariant).
    N_pad = T_pad * B_pad
    feats = x.reshape(N_pad, Hp)                           # bf16
    tgt_tm = jnp.zeros((T_pad, B_pad), jnp.int32).at[:T, :B].set(targets.T)
    tN = _pick_row_tile(N_pad, 512)
    rowloss = decoder_ce_pallas(feats, kp["dec_w"], kp["dec_b"],
                                tgt_tm.reshape(N_pad, 1), V,
                                tN=tN, tV=kp["tV"], vmem_limit=vmem_limit)
    loss = jnp.mean(rowloss.reshape(T_pad, B_pad)[:T, :B])
    return loss, (jnp.stack(new_h), jnp.stack(new_c))


# ----------------------------------------------------------------------------
# Pure-JAX reference (f32) for a sanity check
# ----------------------------------------------------------------------------
def reference_forward(params, indices, targets, state):
    h_state, c_state = state
    emb = jnp.take(params["embedding"], indices, axis=0)
    x = jnp.transpose(emb, (1, 0, 2))
    T = x.shape[0]
    H = x.shape[-1]
    new_h, new_c = [], []
    for l in range(len(params["lstm"])):
        w_ih, w_hh, b_ih, b_hh = params["lstm"][l]
        h, c = h_state[l], c_state[l]
        ys = []
        for t in range(T):
            gates = x[t] @ w_ih.T + b_ih + h @ w_hh.T + b_hh
            i_g = jax.nn.sigmoid(gates[:, 0 * H:1 * H])
            f_g = jax.nn.sigmoid(gates[:, 1 * H:2 * H])
            g_g = jnp.tanh(gates[:, 2 * H:3 * H])
            o_g = jax.nn.sigmoid(gates[:, 3 * H:4 * H])
            c = f_g * c + i_g * g_g
            h = o_g * jnp.tanh(c)
            ys.append(h)
        x = jnp.stack(ys)
        new_h.append(h)
        new_c.append(c)
    feats = jnp.transpose(x, (1, 0, 2)).reshape(-1, H)
    logits = feats @ params["decoder_w"].T + params["decoder_b"]
    tgt = targets.reshape(-1)
    lse = jax.nn.logsumexp(logits, axis=-1)
    loss = jnp.mean(lse - jnp.take_along_axis(logits, tgt[:, None], axis=1)[:, 0])
    return loss, (jnp.stack(new_h), jnp.stack(new_c))


# ----------------------------------------------------------------------------
# Deterministic parameter init (shapes from the module's __init__, tying=True)
# ----------------------------------------------------------------------------
def init_params(key, vocab_size, num_layers, hidden_dim):
    k_emb, k_lstm, k_bias = jax.random.split(key, 3)
    embedding = jax.random.normal(k_emb, (vocab_size, hidden_dim), jnp.float32)
    bound = 1.0 / jnp.sqrt(hidden_dim)
    lstm = []
    keys = jax.random.split(k_lstm, num_layers * 4)
    for l in range(num_layers):
        w_ih = jax.random.uniform(keys[4 * l + 0], (4 * hidden_dim, hidden_dim),
                                  jnp.float32, -bound, bound)
        w_hh = jax.random.uniform(keys[4 * l + 1], (4 * hidden_dim, hidden_dim),
                                  jnp.float32, -bound, bound)
        b_ih = jax.random.uniform(keys[4 * l + 2], (4 * hidden_dim,),
                                  jnp.float32, -bound, bound)
        b_hh = jax.random.uniform(keys[4 * l + 3], (4 * hidden_dim,),
                                  jnp.float32, -bound, bound)
        lstm.append((w_ih, w_hh, b_ih, b_hh))
    decoder_b = jax.random.uniform(k_bias, (vocab_size,), jnp.float32,
                                   -bound, bound)
    return {
        "embedding": embedding,
        "lstm": lstm,
        "decoder_w": embedding,        # weight tying
        "decoder_b": decoder_b,
    }


if __name__ == "__main__":
    VOCAB, LAYERS, HIDDEN = 64, 2, 32
    B, T = 2, 8

    key = jax.random.PRNGKey(0)
    k_params, k_idx, k_tgt = jax.random.split(key, 3)
    params = init_params(k_params, VOCAB, LAYERS, HIDDEN)
    kparams = prepare_kernel_params(params)   # one-time pad + bf16 cast

    indices = jax.random.randint(k_idx, (B, T), 0, VOCAB, jnp.int32)
    targets = jax.random.randint(k_tgt, (B, T), 0, VOCAB, jnp.int32)
    state0 = (jnp.zeros((LAYERS, B, HIDDEN), jnp.float32),
              jnp.zeros((LAYERS, B, HIDDEN), jnp.float32))

    loss, (h_out, c_out) = lstm_lm_wrapper_forward(kparams, indices, targets,
                                                   state0)
    jax.block_until_ready(loss)
    jax.block_until_ready(h_out)
    jax.block_until_ready(c_out)

    # Sanity check against a pure-JAX f32 reference (kernel matmuls are bf16).
    ref_loss, (ref_h, ref_c) = reference_forward(params, indices, targets,
                                                 state0)
    assert jnp.allclose(loss, ref_loss, rtol=2e-2, atol=2e-2), (loss, ref_loss)
    assert jnp.allclose(h_out, ref_h, rtol=2e-2, atol=2e-2)
    assert jnp.allclose(c_out, ref_c, rtol=2e-2, atol=2e-2)

    print("KERNEL_OK")
</pallas_src>

<mosaic_0001>
module attributes {stable_mosaic.version = 11 : i64} {
  func.func @kernel(%arg0: i32, %arg1: i32, %arg2: memref<8x16x128xbf16, #tpu.memory_space<vmem>>, %arg3: memref<16x128xf32, #tpu.memory_space<vmem>>, %arg4: memref<16x128xf32, #tpu.memory_space<vmem>>, %arg5: memref<512x128xbf16, #tpu.memory_space<vmem>>, %arg6: memref<512x128xbf16, #tpu.memory_space<vmem>>, %arg7: memref<1x512xf32, #tpu.memory_space<vmem>>, %arg8: memref<8x16x128xbf16, #tpu.memory_space<vmem>>, %arg9: memref<16x128xf32, #tpu.memory_space<vmem>>, %arg10: memref<16x128xf32, #tpu.memory_space<vmem>>, %arg11: memref<16x128xf32, #tpu.memory_space<vmem>>, %arg12: memref<16x128xf32, #tpu.memory_space<vmem>>, %arg13: memref<128x512xf32, #tpu.memory_space<vmem>>) attributes {dimension_semantics = [#tpu.dimension_semantics<parallel>, #tpu.dimension_semantics<arbitrary>], iteration_bounds = array<i64: 1, 1>, scalar_prefetch = 0 : i64, scratch_operands = 3 : i64, tpu.core_type = #tpu.core_type<tc>, window_params = [{transform_indices = @transform_0, window_bounds = array<i64: 8, 16, 128>}, {transform_indices = @transform_1, window_bounds = array<i64: 16, 128>}, {transform_indices = @transform_2, window_bounds = array<i64: 16, 128>}, {pipeline_mode = #tpu.pipeline_mode<synchronous>, transform_indices = @transform_3, window_bounds = array<i64: 512, 128>}, {pipeline_mode = #tpu.pipeline_mode<synchronous>, transform_indices = @transform_4, window_bounds = array<i64: 512, 128>}, {pipeline_mode = #tpu.pipeline_mode<synchronous>, transform_indices = @transform_5, window_bounds = array<i64: 1, 512>}, {transform_indices = @transform_6, window_bounds = array<i64: 8, 16, 128>}, {transform_indices = @transform_7, window_bounds = array<i64: 16, 128>}, {transform_indices = @transform_8, window_bounds = array<i64: 16, 128>}]} {
    %c0_i32 = arith.constant 0 : i32
    %0 = arith.cmpi eq, %arg1, %c0_i32 : i32
    %1 = arith.extui %0 : i1 to i32
    %c0_i32_0 = arith.constant 0 : i32
    %2 = arith.cmpi ne, %1, %c0_i32_0 : i32
    scf.if %2 {
      %c0_20 = arith.constant 0 : index
      %c0_21 = arith.constant 0 : index
      %23 = vector.load %arg3[%c0_20, %c0_21] : memref<16x128xf32, #tpu.memory_space<vmem>>, vector<16x128xf32>
      %c0_22 = arith.constant 0 : index
      %c0_23 = arith.constant 0 : index
      %24 = vector.load %arg11[%c0_22, %c0_23] : memref<16x128xf32, #tpu.memory_space<vmem>>, vector<16x128xf32>
      tpu.vector_store %arg11[%c0_22, %c0_23], %23 {strides = array<i32>} : memref<16x128xf32, #tpu.memory_space<vmem>>, vector<16x128xf32>,
      %c0_24 = arith.constant 0 : index
      %c0_25 = arith.constant 0 : index
      %25 = vector.load %arg4[%c0_24, %c0_25] : memref<16x128xf32, #tpu.memory_space<vmem>>, vector<16x128xf32>
      %c0_26 = arith.constant 0 : index
      %c0_27 = arith.constant 0 : index
      %26 = vector.load %arg12[%c0_26, %c0_27] : memref<16x128xf32, #tpu.memory_space<vmem>>, vector<16x128xf32>
      tpu.vector_store %arg12[%c0_26, %c0_27], %25 {strides = array<i32>} : memref<16x128xf32, #tpu.memory_space<vmem>>, vector<16x128xf32>,
    } else {
    }
    %c0 = arith.constant 0 : index
    %c0_1 = arith.constant 0 : index
    %c0_2 = arith.constant 0 : index
    %3 = vector.load %arg2[%c0, %c0_1, %c0_2] : memref<8x16x128xbf16, #tpu.memory_space<vmem>>, vector<8x16x128xbf16>
    %4 = vector.shape_cast %3 : vector<8x16x128xbf16> to vector<128x128xbf16>
    %c0_3 = arith.constant 0 : index
    %c0_4 = arith.constant 0 : index
    %5 = vector.load %arg5[%c0_3, %c0_4] : memref<512x128xbf16, #tpu.memory_space<vmem>>, vector<512x128xbf16>
    %cst = arith.constant dense<0.000000e+00> : vector<128x512xf32>
    %6 = tpu.matmul %4, %5, %cst {dimension_numbers = #tpu.dot_dimension_numbers<[1], [1], [0], [0], [0, 0, 1, 0], [], []>} : vector<128x128xbf16>, vector<512x128xbf16>, vector<128x512xf32> -> vector<128x512xf32>
    %c0_5 = arith.constant 0 : index
    %c0_6 = arith.constant 0 : index
    %7 = vector.load %arg7[%c0_5, %c0_6] : memref<1x512xf32, #tpu.memory_space<vmem>>, vector<1x512xf32>
    %8 = vector.broadcast %7 : vector<1x512xf32> to vector<128x512xf32>
    %9 = arith.addf %6, %8 : vector<128x512xf32>
    %c0_7 = arith.constant 0 : index
    %c0_8 = arith.constant 0 : index
    %10 = vector.load %arg13[%c0_7, %c0_8] : memref<128x512xf32, #tpu.memory_space<vmem>>, vector<128x512xf32>
    tpu.vector_store %arg13[%c0_7, %c0_8], %9 {strides = array<i32>} : memref<128x512xf32, #tpu.memory_space<vmem>>, vector<128x512xf32>,
    %c8_i32 = arith.constant 8 : i32
    %11 = arith.muli %arg1, %c8_i32 : i32
    %c8_i32_9 = arith.constant 8 : i32
    %12 = arith.subi %c8_i32_9, %11 : i32
    %c8_i32_10 = arith.constant 8 : i32
    %13 = arith.minsi %c8_i32_10, %12 : i32
    %c0_i32_11 = arith.constant 0 : i32
    %c0_i32_12 = arith.constant 0 : i32
    %14 = arith.subi %13, %c0_i32_12 : i32
    %15 = arith.addi %c0_i32_12, %14 : i32
    %c1_i32 = arith.constant 1 : i32
    scf.for %arg14 = %c0_i32_12 to %15 step %c1_i32  : i32 {
      %c0_20 = arith.constant 0 : index
      %c0_21 = arith.constant 0 : index
      %23 = vector.load %arg11[%c0_20, %c0_21] : memref<16x128xf32, #tpu.memory_space<vmem>>, vector<16x128xf32>
      %c16_i32 = arith.constant 16 : i32
      %24 = arith.muli %arg14, %c16_i32 : i32
      %25 = tpu.assume_multiple %24, 16 : i32
      %26 = arith.index_cast %25 : i32 to index
      %c0_22 = arith.constant 0 : index
      %27 = vector.load %arg13[%26, %c0_22] : memref<128x512xf32, #tpu.memory_space<vmem>>, vector<16x512xf32>
      %28 = arith.truncf %23 : vector<16x128xf32> to vector<16x128xbf16>
      %c0_23 = arith.constant 0 : index
      %c0_24 = arith.constant 0 : index
      %29 = vector.load %arg6[%c0_23, %c0_24] : memref<512x128xbf16, #tpu.memory_space<vmem>>, vector<512x128xbf16>
      %cst_25 = arith.constant dense<0.000000e+00> : vector<16x512xf32>
      %30 = tpu.matmul %28, %29, %cst_25 {dimension_numbers = #tpu.dot_dimension_numbers<[1], [1], [0], [0], [0, 0, 1, 0], [], []>} : vector<16x128xbf16>, vector<512x128xbf16>, vector<16x512xf32> -> vector<16x512xf32>
      %31 = arith.addf %27, %30 : vector<16x512xf32>
      %32 = vector.extract_strided_slice %31 {offsets = [0, 0], sizes = [16, 128], strides = [1, 1]} : vector<16x512xf32> to vector<16x128xf32>
      %33 = arith.negf %32 : vector<16x128xf32>
      %34 = math.exp %33 : vector<16x128xf32>
      %cst_26 = arith.constant 1.000000e+00 : f32
      %35 = vector.broadcast %cst_26 : f32 to vector<16x128xf32>
      %36 = arith.addf %35, %34 : vector<16x128xf32>
      %37 = arith.divf %35, %36 : vector<16x128xf32>
      %38 = vector.extract_strided_slice %31 {offsets = [0, 128], sizes = [16, 128], strides = [1, 1]} : vector<16x512xf32> to vector<16x128xf32>
      %39 = arith.negf %38 : vector<16x128xf32>
      %40 = math.exp %39 : vector<16x128xf32>
      %cst_27 = arith.constant 1.000000e+00 : f32
      %41 = vector.broadcast %cst_27 : f32 to vector<16x128xf32>
      %42 = arith.addf %41, %40 : vector<16x128xf32>
      %43 = arith.divf %41, %42 : vector<16x128xf32>
      %44 = vector.extract_strided_slice %31 {offsets = [0, 256], sizes = [16, 128], strides = [1, 1]} : vector<16x512xf32> to vector<16x128xf32>
      %45 = math.tanh %44 : vector<16x128xf32>
      %46 = vector.extract_strided_slice %31 {offsets = [0, 384], sizes = [16, 128], strides = [1, 1]} : vector<16x512xf32> to vector<16x128xf32>
      %47 = arith.negf %46 : vector<16x128xf32>
      %48 = math.exp %47 : vector<16x128xf32>
      %cst_28 = arith.constant 1.000000e+00 : f32
      %49 = vector.broadcast %cst_28 : f32 to vector<16x128xf32>
      %50 = arith.addf %49, %48 : vector<16x128xf32>
      %51 = arith.divf %49, %50 : vector<16x128xf32>
      %c0_29 = arith.constant 0 : index
      %c0_30 = arith.constant 0 : index
      %52 = vector.load %arg12[%c0_29, %c0_30] : memref<16x128xf32, #tpu.memory_space<vmem>>, vector<16x128xf32>
      %53 = arith.mulf %43, %52 : vector<16x128xf32>
      %54 = arith.mulf %37, %45 : vector<16x128xf32>
      %55 = arith.addf %53, %54 : vector<16x128xf32>
      %56 = math.tanh %55 : vector<16x128xf32>
      %57 = arith.mulf %51, %56 : vector<16x128xf32>
      %c0_31 = arith.constant 0 : index
      %c0_32 = arith.constant 0 : index
      %58 = vector.load %arg11[%c0_31, %c0_32] : memref<16x128xf32, #tpu.memory_space<vmem>>, vector<16x128xf32>
      tpu.vector_store %arg11[%c0_31, %c0_32], %57 {strides = array<i32>} : memref<16x128xf32, #tpu.memory_space<vmem>>, vector<16x128xf32>,
      %c0_33 = arith.constant 0 : index
      %c0_34 = arith.constant 0 : index
      %59 = vector.load %arg12[%c0_33, %c0_34] : memref<16x128xf32, #tpu.memory_space<vmem>>, vector<16x128xf32>
      tpu.vector_store %arg12[%c0_33, %c0_34], %55 {strides = array<i32>} : memref<16x128xf32, #tpu.memory_space<vmem>>, vector<16x128xf32>,
      %60 = arith.truncf %57 : vector<16x128xf32> to vector<16x128xbf16>
      %61 = arith.index_cast %arg14 : i32 to index
      %c0_35 = arith.constant 0 : index
      %c0_36 = arith.constant 0 : index
      %62 = vector.load %arg8[%61, %c0_35, %c0_36] : memref<8x16x128xbf16, #tpu.memory_space<vmem>>, vector<1x16x128xbf16>
      %63 = vector.shape_cast %62 : vector<1x16x128xbf16> to vector<16x128xbf16>
      %64 = vector.shape_cast %60 : vector<16x128xbf16> to vector<1x16x128xbf16>
      tpu.vector_store %arg8[%61, %c0_35, %c0_36], %64 {strides = array<i32>} : memref<8x16x128xbf16, #tpu.memory_space<vmem>>, vector<1x16x128xbf16>,
    }
    %c0_13 = arith.constant 0 : index
    %c0_14 = arith.constant 0 : index
    %16 = vector.load %arg11[%c0_13, %c0_14] : memref<16x128xf32, #tpu.memory_space<vmem>>, vector<16x128xf32>
    %17 = arith.truncf %16 : vector<16x128xf32> to vector<16x128xbf16>
    %c0_i32_15 = arith.constant 0 : i32
    %c8_i32_16 = arith.constant 8 : i32
    %18 = arith.subi %c8_i32_16, %13 : i32
    %19 = arith.addi %13, %18 : i32
    %c1_i32_17 = arith.constant 1 : i32
    scf.for %arg14 = %13 to %19 step %c1_i32_17  : i32 {
      %23 = arith.index_cast %arg14 : i32 to index
      %c0_20 = arith.constant 0 : index
      %c0_21 = arith.constant 0 : index
      %24 = vector.load %arg8[%23, %c0_20, %c0_21] : memref<8x16x128xbf16, #tpu.memory_space<vmem>>, vector<1x16x128xbf16>
      %25 = vector.shape_cast %24 : vector<1x16x128xbf16> to vector<16x128xbf16>
      %26 = vector.shape_cast %17 : vector<16x128xbf16> to vector<1x16x128xbf16>
      tpu.vector_store %arg8[%23, %c0_20, %c0_21], %26 {strides = array<i32>} : memref<8x16x128xbf16, #tpu.memory_space<vmem>>, vector<1x16x128xbf16>,
    }
    %c0_i32_18 = arith.constant 0 : i32
    %20 = arith.cmpi eq, %arg1, %c0_i32_18 : i32
    %21 = arith.extui %20 : i1 to i32
    %c0_i32_19 = arith.constant 0 : i32
    %22 = arith.cmpi ne, %21, %c0_i32_19 : i32
    scf.if %22 {
      %c0_20 = arith.constant 0 : index
      %c0_21 = arith.constant 0 : index
      %23 = vector.load %arg11[%c0_20, %c0_21] : memref<16x128xf32, #tpu.memory_space<vmem>>, vector<16x128xf32>
      %c0_22 = arith.constant 0 : index
      %c0_23 = arith.constant 0 : index
      %24 = vector.load %arg9[%c0_22, %c0_23] : memref<16x128xf32, #tpu.memory_space<vmem>>, vector<16x128xf32>
      tpu.vector_store %arg9[%c0_22, %c0_23], %23 {strides = array<i32>} : memref<16x128xf32, #tpu.memory_space<vmem>>, vector<16x128xf32>,
      %c0_24 = arith.constant 0 : index
      %c0_25 = arith.constant 0 : index
      %25 = vector.load %arg12[%c0_24, %c0_25] : memref<16x128xf32, #tpu.memory_space<vmem>>, vector<16x128xf32>
      %c0_26 = arith.constant 0 : index
      %c0_27 = arith.constant 0 : index
      %26 = vector.load %arg10[%c0_26, %c0_27] : memref<16x128xf32, #tpu.memory_space<vmem>>, vector<16x128xf32>
      tpu.vector_store %arg10[%c0_26, %c0_27], %25 {strides = array<i32>} : memref<16x128xf32, #tpu.memory_space<vmem>>, vector<16x128xf32>,
    } else {
    }
    return
  }
  func.func @transform_0(%arg0: i32, %arg1: i32) -> (i32, i32, i32) {
    %c0_i32 = arith.constant 0 : i32
    %c0_i32_0 = arith.constant 0 : i32
    return %arg1, %arg0, %c0_i32 : i32, i32, i32
  }
  func.func @transform_1(%arg0: i32, %arg1: i32) -> (i32, i32) {
    %c0_i32 = arith.constant 0 : i32
    %c0_i32_0 = arith.constant 0 : i32
    return %arg0, %c0_i32 : i32, i32
  }
  func.func @transform_2(%arg0: i32, %arg1: i32) -> (i32, i32) {
    %c0_i32 = arith.constant 0 : i32
    %c0_i32_0 = arith.constant 0 : i32
    return %arg0, %c0_i32 : i32, i32
  }
  func.func @transform_3(%arg0: i32, %arg1: i32) -> (i32, i32) {
    %c0_i32 = arith.constant 0 : i32
    %c0_i32_0 = arith.constant 0 : i32
    %c0_i32_1 = arith.constant 0 : i32
    return %c0_i32, %c0_i32_0 : i32, i32
  }
  func.func @transform_4(%arg0: i32, %arg1: i32) -> (i32, i32) {
    %c0_i32 = arith.constant 0 : i32
    %c0_i32_0 = arith.constant 0 : i32
    %c0_i32_1 = arith.constant 0 : i32
    return %c0_i32, %c0_i32_0 : i32, i32
  }
  func.func @transform_5(%arg0: i32, %arg1: i32) -> (i32, i32) {
    %c0_i32 = arith.constant 0 : i32
    %c0_i32_0 = arith.constant 0 : i32
    %c0_i32_1 = arith.constant 0 : i32
    return %c0_i32, %c0_i32_0 : i32, i32
  }
  func.func @transform_6(%arg0: i32, %arg1: i32) -> (i32, i32, i32) {
    %c0_i32 = arith.constant 0 : i32
    %c0_i32_0 = arith.constant 0 : i32
    return %arg1, %arg0, %c0_i32 : i32, i32, i32
  }
  func.func @transform_7(%arg0: i32, %arg1: i32) -> (i32, i32) {
    %c0_i32 = arith.constant 0 : i32
    %c0_i32_0 = arith.constant 0 : i32
    return %arg0, %c0_i32 : i32, i32
  }
  func.func @transform_8(%arg0: i32, %arg1: i32) -> (i32, i32) {
    %c0_i32 = arith.constant 0 : i32
    %c0_i32_0 = arith.constant 0 : i32
    return %arg0, %c0_i32 : i32, i32
  }
}

</mosaic_0001>

<llo_original>
// kernel: tpu_custom_call.1
$region0: #{tpu_custom_call.1}
  #allocation0 [shape = 'u32[]', space=smem, size = 0x4, offset = 0x4, fixed_abs, tag = 'smem constant byte address 0x4 - core index']
  #allocation1 [shape = 'u32[72,128]{1,0:T(1,128)}', space=vmem, size = 0x9000, scoped, tag = 'internal scratch']
  #allocation2 [shape = 'f32[16,128]{1,0:T(8,128)}', space=vmem, size = 0x2000, scoped, tag = 'scratch operand']
  #allocation3 [shape = 'f32[16,128]{1,0:T(8,128)}', space=vmem, size = 0x2000, scoped, tag = 'scratch operand']
  #allocation4 [shape = 'f32[128,512]{1,0:T(8,128)}', space=vmem, size = 0x40000, scoped, tag = 'scratch operand']
  %s0 = inlined_call_operand.hbm [shape: bf16[8,16,128], index: 0, kind: input, shape index: {}]
  %s1 = inlined_call_operand.hbm [shape: f32[16,128], index: 1, kind: input, shape index: {}]
  %s2 = inlined_call_operand.hbm [shape: f32[16,128], index: 2, kind: input, shape index: {}]
  %s3 = inlined_call_operand.hbm [shape: bf16[512,128], index: 3, kind: input, shape index: {}]
  %s4 = inlined_call_operand.hbm [shape: bf16[512,128], index: 4, kind: input, shape index: {}]
  %s5 = inlined_call_operand.vmem [shape: f32[1,512], index: 5, kind: input, shape index: {}]
  %s6 = inlined_call_operand.hbm [shape: bf16[8,16,128], index: 6, kind: output, shape index: {0}]
  %s7 = inlined_call_operand.hbm [shape: f32[16,128], index: 7, kind: output, shape index: {1}]
  %s8 = inlined_call_operand.hbm [shape: f32[16,128], index: 8, kind: output, shape index: {2}]
  %9 = xla_tuple %s6, %s7, %s8
  %s10 = sld [smem:[#allocation0]]
  $region92: #{tpu_custom_call.1} parent=0
    _
  %s12 = ssub.s32 1, %s10
  %s13 = scalar_select 0, %s12, %s10
  $region1: #{tpu_custom_call.1} parent=0
    #allocation5 [shape = 'u8[32768]{0}', space=vmem, size = 0x8000, scoped, tag = 'input window, operand 0, single buffered']
    #allocation6 [shape = 's32[1]{0}', space=sflag, size = 0x4, scoped, tag = 'scoped memory for tpu_custom_call.1']
    #allocation7 [shape = 's32[1]{0}', space=sflag, size = 0x4, scoped, tag = 'scoped memory for tpu_custom_call.1']
    #allocation8 [shape = 'u8[8192]{0}', space=vmem, size = 0x2000, scoped, tag = 'input window, operand 1, single buffered']
    #allocation9 [shape = 's32[1]{0}', space=sflag, size = 0x4, scoped, tag = 'scoped memory for tpu_custom_call.1']
    #allocation10 [shape = 'u8[8192]{0}', space=vmem, size = 0x2000, scoped, tag = 'input window, operand 2, single buffered']
    #allocation11 [shape = 'u8[131072]{0}', space=vmem, size = 0x20000, scoped, tag = 'input window, operand 3, single buffered']
    #allocation12 [shape = 's32[1]{0}', space=sflag, size = 0x4, scoped, tag = 'scoped memory for tpu_custom_call.1']
    #allocation13 [shape = 'u8[131072]{0}', space=vmem, size = 0x20000, scoped, tag = 'input window, operand 4, single buffered']
    #allocation14 [shape = 'u8[32768]{0}', space=vmem, size = 0x8000, scoped, tag = 'output window, operand 0, single buffered']
    #allocation15 [shape = 'u8[8192]{0}', space=vmem, size = 0x2000, scoped, tag = 'output window, operand 1, single buffered']
    #allocation16 [shape = 's32[1]{0}', space=sflag, size = 0x4, scoped, tag = 'scoped memory for tpu_custom_call.1']
    #allocation17 [shape = 'u8[8192]{0}', space=vmem, size = 0x2000, scoped, tag = 'output window, operand 2, single buffered']
    %14 = vsyncpa [#allocation6], 0
    %15 = vsyncpa [#allocation9], 0
    %16 = vsyncpa [#allocation12], 0
    %17 = vsyncpa [#allocation7], 0
    %18 = vsyncpa [#allocation16], 0
    // Predicated region
    $region2: #{tpu_custom_call.1} parent=1 // pred_check
      _
    $region3: #{tpu_custom_call.1} parent=1 // pred_check_branch
      %20 = sbr.rel (0) target = $region5
    $region4: #{tpu_custom_call.1} parent=1 // pred_region
      %22 = vsyncadd [#allocation6], 0
      %s23 = sshll.u32 %s0, 4
      %s24 = int_to_ptr.hbm [resolvable:$true] %s23
      %s25 = sshll.u32 [#allocation5], 4
      %s26 = int_to_ptr.vmem [resolvable:$true] %s25
      %31 = dma.hbm_to_vmem [thread:$0]  %s24, 1024, %s26, [#allocation6], 64, 64, 4
    $region5: #{tpu_custom_call.1} parent=1 // pred_fallthru
      _
    // Predicated region
    $region6: #{tpu_custom_call.1} parent=1 // pred_check
      _
    $region7: #{tpu_custom_call.1} parent=1 // pred_check_branch
      %33 = sbr.rel (0) target = $region9
    $region8: #{tpu_custom_call.1} parent=1 // pred_region
      %35 = vsyncadd [#allocation9], 0
      %s36 = sshll.u32 %s1, 4
      %s37 = int_to_ptr.hbm [resolvable:$true] %s36
      %s38 = sshll.u32 [#allocation8], 4
      %s39 = int_to_ptr.vmem [resolvable:$true] %s38
      %44 = dma.hbm_to_vmem [thread:$0]  %s37, 256, %s39, [#allocation9], 128, 128, 8
    $region9: #{tpu_custom_call.1} parent=1 // pred_fallthru
      _
    // Predicated region
    $region10: #{tpu_custom_call.1} parent=1 // pred_check
      _
    $region11: #{tpu_custom_call.1} parent=1 // pred_check_branch
      %46 = sbr.rel (0) target = $region13
    $region12: #{tpu_custom_call.1} parent=1 // pred_region
      %48 = vsyncadd [#allocation9], 0
      %s49 = sshll.u32 %s2, 4
      %s50 = int_to_ptr.hbm [resolvable:$true] %s49
      %s51 = sshll.u32 [#allocation10], 4
      %s52 = int_to_ptr.vmem [resolvable:$true] %s51
      %57 = dma.hbm_to_vmem [thread:$0]  %s50, 256, %s52, [#allocation9], 128, 128, 8
    $region13: #{tpu_custom_call.1} parent=1 // pred_fallthru
      _
    // Predicated region
    $region14: #{tpu_custom_call.1} parent=1 // pred_check
      _
    $region15: #{tpu_custom_call.1} parent=1 // pred_check_branch
      %59 = sbr.rel (0) target = $region17
    $region16: #{tpu_custom_call.1} parent=1 // pred_region
      %61 = vsyncadd [#allocation12], 0
      %s62 = sshll.u32 %s3, 4
      %s63 = int_to_ptr.hbm [resolvable:$true] %s62
      %s64 = sshll.u32 [#allocation11], 4
      %s65 = int_to_ptr.vmem [resolvable:$true] %s64
      %70 = dma.hbm_to_vmem [thread:$0]  %s63, 4096, %s65, [#allocation12], 64, 64, 4
    $region17: #{tpu_custom_call.1} parent=1 // pred_fallthru
      _
    // Predicated region
    $region18: #{tpu_custom_call.1} parent=1 // pred_check
      _
    $region19: #{tpu_custom_call.1} parent=1 // pred_check_branch
      %72 = sbr.rel (0) target = $region21
    $region20: #{tpu_custom_call.1} parent=1 // pred_region
      %74 = vsyncadd [#allocation12], 0
      %s75 = sshll.u32 %s4, 4
      %s76 = int_to_ptr.hbm [resolvable:$true] %s75
      %s77 = sshll.u32 [#allocation13], 4
      %s78 = int_to_ptr.vmem [resolvable:$true] %s77
      %83 = dma.hbm_to_vmem [thread:$0]  %s76, 4096, %s78, [#allocation12], 64, 64, 4
    $region21: #{tpu_custom_call.1} parent=1 // pred_fallthru
      _
    // Predicated region
    $region22: #{tpu_custom_call.1} parent=1 // pred_check
      _
    $region23: #{tpu_custom_call.1} parent=1 // pred_check_branch
      %85 = sbr.rel (0) target = $region25
    $region24: #{tpu_custom_call.1} parent=1 // pred_region
      _
    $region25: #{tpu_custom_call.1} parent=1 // pred_fallthru
      _
    // Predicated region
    $region26: #{tpu_custom_call.1} parent=1 // pred_check
      _
    $region27: #{tpu_custom_call.1} parent=1 // pred_check_branch
      %87 = sbr.rel (0) target = $region29
    $region28: #{tpu_custom_call.1} parent=1 // pred_region
      %89 = dma.done [#allocation6], 1024
    $region29: #{tpu_custom_call.1} parent=1 // pred_fallthru
      _
    // Predicated region
    $region30: #{tpu_custom_call.1} parent=1 // pred_check
      _
    $region31: #{tpu_custom_call.1} parent=1 // pred_check_branch
      %91 = sbr.rel (0) target = $region33
    $region32: #{tpu_custom_call.1} parent=1 // pred_region
      %93 = dma.done [#allocation9], 256
    $region33: #{tpu_custom_call.1} parent=1 // pred_fallthru
      _
    // Predicated region
    $region34: #{tpu_custom_call.1} parent=1 // pred_check
      _
    $region35: #{tpu_custom_call.1} parent=1 // pred_check_branch
      %95 = sbr.rel (0) target = $region37
    $region36: #{tpu_custom_call.1} parent=1 // pred_region
      %97 = dma.done [#allocation9], 256
    $region37: #{tpu_custom_call.1} parent=1 // pred_fallthru
      _
    // Predicated region
    $region38: #{tpu_custom_call.1} parent=1 // pred_check
      _
    $region39: #{tpu_custom_call.1} parent=1 // pred_check_branch
      %99 = sbr.rel (0) target = $region41
    $region40: #{tpu_custom_call.1} parent=1 // pred_region
      %101 = dma.done [#allocation12], 4096
    $region41: #{tpu_custom_call.1} parent=1 // pred_fallthru
      _
    // Predicated region
    $region42: #{tpu_custom_call.1} parent=1 // pred_check
      _
    $region43: #{tpu_custom_call.1} parent=1 // pred_check_branch
      %103 = sbr.rel (0) target = $region45
    $region44: #{tpu_custom_call.1} parent=1 // pred_region
      %105 = dma.done [#allocation12], 4096
    $region45: #{tpu_custom_call.1} parent=1 // pred_fallthru
      _
    %p106 = scmp.eq.s32.totalorder 0, 0
    // Predicated region
    $region46: #{tpu_custom_call.1} parent=1 // pred_check
      %p107 = pneg %p106
    $region47: #{tpu_custom_call.1} parent=1 // pred_check_branch
      %109 = sbr.rel (%p107) target = $region49
    $region48: #{tpu_custom_call.1} parent=1 // pred_region
      %v110 = vld [vmem:[#allocation8] sm:$0xff]
      %v111 = vld [vmem:[#allocation8 + $0x8] sm:$0xff]
      %112 = vst [vmem:[#allocation2] sm:$0xff] %v110
      %113 = vst [vmem:[#allocation2 + $0x8] sm:$0xff] %v111
      %v114 = vld [vmem:[#allocation10] sm:$0xff]
      %v115 = vld [vmem:[#allocation10 + $0x8] sm:$0xff]
      %116 = vst [vmem:[#allocation3] sm:$0xff] %v114
      %117 = vst [vmem:[#allocation3 + $0x8] sm:$0xff] %v115
    $region49: #{tpu_custom_call.1} parent=1 // pred_fallthru
      _
    %v118 = vld [vmem:[#allocation5] sm:$0xf]
    %v119 = vld [vmem:[#allocation5 + $0x4] sm:$0xf]
    %v120 = vld [vmem:[#allocation5 + $0x8] sm:$0xf]
    %v121 = vld [vmem:[#allocation5 + $0xc] sm:$0xf]
    %v122 = vld [vmem:[#allocation5 + $0x10] sm:$0xf]
    %v123 = vld [vmem:[#allocation5 + $0x14] sm:$0xf]
    %v124 = vld [vmem:[#allocation5 + $0x18] sm:$0xf]
    %v125 = vld [vmem:[#allocation5 + $0x1c] sm:$0xf]
    %v126 = vld [vmem:[#allocation5 + $0x20] sm:$0xf]
    %v127 = vld [vmem:[#allocation5 + $0x24] sm:$0xf]
    %v128 = vld [vmem:[#allocation5 + $0x28] sm:$0xf]
    %v129 = vld [vmem:[#allocation5 + $0x2c] sm:$0xf]
    %v130 = vld [vmem:[#allocation5 + $0x30] sm:$0xf]
    %v131 = vld [vmem:[#allocation5 + $0x34] sm:$0xf]
    %v132 = vld [vmem:[#allocation5 + $0x38] sm:$0xf]
    %v133 = vld [vmem:[#allocation5 + $0x3c] sm:$0xf]
    %v134 = vld [vmem:[#allocation11] sm:$0xf]
    %v135 = vld [vmem:[#allocation11 + $0x4] sm:$0xf]
    %v136 = vld [vmem:[#allocation11 + $0x8] sm:$0xf]
    %v137 = vld [vmem:[#allocation11 + $0xc] sm:$0xf]
    %v138 = vld [vmem:[#allocation11 + $0x10] sm:$0xf]
    %v139 = vld [vmem:[#allocation11 + $0x14] sm:$0xf]
    %v140 = vld [vmem:[#allocation11 + $0x18] sm:$0xf]
    %v141 = vld [vmem:[#allocation11 + $0x1c] sm:$0xf]
    %v142 = vld [vmem:[#allocation11 + $0x20] sm:$0xf]
    %v143 = vld [vmem:[#allocation11 + $0x24] sm:$0xf]
    %v144 = vld [vmem:[#allocation11 + $0x28] sm:$0xf]
    %v145 = vld [vmem:[#allocation11 + $0x2c] sm:$0xf]
    %v146 = vld [vmem:[#allocation11 + $0x30] sm:$0xf]
    %v147 = vld [vmem:[#allocation11 + $0x34] sm:$0xf]
    %v148 = vld [vmem:[#allocation11 + $0x38] sm:$0xf]
    %v149 = vld [vmem:[#allocation11 + $0x3c] sm:$0xf]
    %v150 = vld [vmem:[#allocation11 + $0x40] sm:$0xf]
    %v151 = vld [vmem:[#allocation11 + $0x44] sm:$0xf]
    %v152 = vld [vmem:[#allocation11 + $0x48] sm:$0xf]
    %v153 = vld [vmem:[#allocation11 + $0x4c] sm:$0xf]
    %v154 = vld [vmem:[#allocation11 + $0x50] sm:$0xf]
    %v155 = vld [vmem:[#allocation11 + $0x54] sm:$0xf]
    %v156 = vld [vmem:[#allocation11 + $0x58] sm:$0xf]
    %v157 = vld [vmem:[#allocation11 + $0x5c] sm:$0xf]
    %v158 = vld [vmem:[#allocation11 + $0x60] sm:$0xf]
    %v159 = vld [vmem:[#allocation11 + $0x64] sm:$0xf]
    %v160 = vld [vmem:[#allocation11 + $0x68] sm:$0xf]
    %v161 = vld [vmem:[#allocation11 + $0x6c] sm:$0xf]
    %v162 = vld [vmem:[#allocation11 + $0x70] sm:$0xf]
    %v163 = vld [vmem:[#allocation11 + $0x74] sm:$0xf]
    %v164 = vld [vmem:[#allocation11 + $0x78] sm:$0xf]
    %v165 = vld [vmem:[#allocation11 + $0x7c] sm:$0xf]
    %v166 = vld [vmem:[#allocation11 + $0x80] sm:$0xf]
    %v167 = vld [vmem:[#allocation11 + $0x84] sm:$0xf]
    %v168 = vld [vmem:[#allocation11 + $0x88] sm:$0xf]
    %v169 = vld [vmem:[#allocation11 + $0x8c] sm:$0xf]
    %v170 = vld [vmem:[#allocation11 + $0x90] sm:$0xf]
    %v171 = vld [vmem:[#allocation11 + $0x94] sm:$0xf]
    %v172 = vld [vmem:[#allocation11 + $0x98] sm:$0xf]
    %v173 = vld [vmem:[#allocation11 + $0x9c] sm:$0xf]
    %v174 = vld [vmem:[#allocation11 + $0xa0] sm:$0xf]
    %v175 = vld [vmem:[#allocation11 + $0xa4] sm:$0xf]
    %v176 = vld [vmem:[#allocation11 + $0xa8] sm:$0xf]
    %v177 = vld [vmem:[#allocation11 + $0xac] sm:$0xf]
    %v178 = vld [vmem:[#allocation11 + $0xb0] sm:$0xf]
    %v179 = vld [vmem:[#allocation11 + $0xb4] sm:$0xf]
    %v180 = vld [vmem:[#allocation11 + $0xb8] sm:$0xf]
    %v181 = vld [vmem:[#allocation11 + $0xbc] sm:$0xf]
    %v182 = vld [vmem:[#allocation11 + $0xc0] sm:$0xf]
    %v183 = vld [vmem:[#allocation11 + $0xc4] sm:$0xf]
    %v184 = vld [vmem:[#allocation11 + $0xc8] sm:$0xf]
    %v185 = vld [vmem:[#allocation11 + $0xcc] sm:$0xf]
    %v186 = vld [vmem:[#allocation11 + $0xd0] sm:$0xf]
    %v187 = vld [vmem:[#allocation11 + $0xd4] sm:$0xf]
    %v188 = vld [vmem:[#allocation11 + $0xd8] sm:$0xf]
    %v189 = vld [vmem:[#allocation11 + $0xdc] sm:$0xf]
    %v190 = vld [vmem:[#allocation11 + $0xe0] sm:$0xf]
    %v191 = vld [vmem:[#allocation11 + $0xe4] sm:$0xf]
    %v192 = vld [vmem:[#allocation11 + $0xe8] sm:$0xf]
    %v193 = vld [vmem:[#allocation11 + $0xec] sm:$0xf]
    %v194 = vld [vmem:[#allocation11 + $0xf0] sm:$0xf]
    %v195 = vld [vmem:[#allocation11 + $0xf4] sm:$0xf]
    %v196 = vld [vmem:[#allocation11 + $0xf8] sm:$0xf]
    %v197 = vld [vmem:[#allocation11 + $0xfc] sm:$0xf]
    %v198 = vld [vmem:[%s5] sm:$0xf]
    %v200 = vperm.slane %v198, 0
    %v201 = vperm.slane %v198, 1
    %v202 = vperm.slane %v198, 2
    %v203 = vperm.slane %v198, 3
    %v224 = vunpack.c.l.b16 %v118
    %v225 = vunpack.c.l.b16 %v119
    %v226 = vunpack.c.l.b16 %v120
    %v227 = vunpack.c.l.b16 %v121
    %v228 = vunpack.c.l.b16 %v122
    %v229 = vunpack.c.l.b16 %v123
    %v230 = vunpack.c.l.b16 %v124
    %v231 = vunpack.c.l.b16 %v125
    %v232 = vunpack.c.l.b16 %v126
    %v233 = vunpack.c.l.b16 %v127
    %v234 = vunpack.c.l.b16 %v128
    %v235 = vunpack.c.l.b16 %v129
    %v236 = vunpack.c.l.b16 %v130
    %v237 = vunpack.c.l.b16 %v131
    %v238 = vunpack.c.l.b16 %v132
    %v239 = vunpack.c.l.b16 %v133
    %v240 = vpack.c.b16 %v225, %v224
    %v241 = vpack.c.b16 %v227, %v226
    %v242 = vpack.c.b16 %v229, %v228
    %v243 = vpack.c.b16 %v231, %v230
    %v244 = vpack.c.b16 %v233, %v232
    %v245 = vpack.c.b16 %v235, %v234
    %v246 = vpack.c.b16 %v237, %v236
    %v247 = vpack.c.b16 %v239, %v238
    %v320 = vunpack.c.l.b16 %v134
    %v321 = vunpack.c.l.b16 %v135
    %v322 = vunpack.c.l.b16 %v136
    %v323 = vunpack.c.l.b16 %v137
    %v324 = vunpack.c.l.b16 %v138
    %v325 = vunpack.c.l.b16 %v139
    %v326 = vunpack.c.l.b16 %v140
    %v327 = vunpack.c.l.b16 %v141
    %v328 = vunpack.c.l.b16 %v142
    %v329 = vunpack.c.l.b16 %v143
    %v330 = vunpack.c.l.b16 %v144
    %v331 = vunpack.c.l.b16 %v145
    %v332 = vunpack.c.l.b16 %v146
    %v333 = vunpack.c.l.b16 %v147
    %v334 = vunpack.c.l.b16 %v148
    %v335 = vunpack.c.l.b16 %v149
    %v336 = vunpack.c.l.b16 %v150
    %v337 = vunpack.c.l.b16 %v151
    %v338 = vunpack.c.l.b16 %v152
    %v339 = vunpack.c.l.b16 %v153
    %v340 = vunpack.c.l.b16 %v154
    %v341 = vunpack.c.l.b16 %v155
    %v342 = vunpack.c.l.b16 %v156
    %v343 = vunpack.c.l.b16 %v157
    %v344 = vunpack.c.l.b16 %v158
    %v345 = vunpack.c.l.b16 %v159
    %v346 = vunpack.c.l.b16 %v160
    %v347 = vunpack.c.l.b16 %v161
    %v348 = vunpack.c.l.b16 %v162
    %v349 = vunpack.c.l.b16 %v163
    %v350 = vunpack.c.l.b16 %v164
    %v351 = vunpack.c.l.b16 %v165
    %v352 = vunpack.c.l.b16 %v166
    %v353 = vunpack.c.l.b16 %v167
    %v354 = vunpack.c.l.b16 %v168
    %v355 = vunpack.c.l.b16 %v169
    %v356 = vunpack.c.l.b16 %v170
    %v357 = vunpack.c.l.b16 %v171
    %v358 = vunpack.c.l.b16 %v172
    %v359 = vunpack.c.l.b16 %v173
    %v360 = vunpack.c.l.b16 %v174
    %v361 = vunpack.c.l.b16 %v175
    %v362 = vunpack.c.l.b16 %v176
    %v363 = vunpack.c.l.b16 %v177
    %v364 = vunpack.c.l.b16 %v178
    %v365 = vunpack.c.l.b16 %v179
    %v366 = vunpack.c.l.b16 %v180
    %v367 = vunpack.c.l.b16 %v181
    %v368 = vunpack.c.l.b16 %v182
    %v369 = vunpack.c.l.b16 %v183
    %v370 = vunpack.c.l.b16 %v184
    %v371 = vunpack.c.l.b16 %v185
    %v372 = vunpack.c.l.b16 %v186
    %v373 = vunpack.c.l.b16 %v187
    %v374 = vunpack.c.l.b16 %v188
    %v375 = vunpack.c.l.b16 %v189
    %v376 = vunpack.c.l.b16 %v190
    %v377 = vunpack.c.l.b16 %v191
    %v378 = vunpack.c.l.b16 %v192
    %v379 = vunpack.c.l.b16 %v193
    %v380 = vunpack.c.l.b16 %v194
    %v381 = vunpack.c.l.b16 %v195
    %v382 = vunpack.c.l.b16 %v196
    %v383 = vunpack.c.l.b16 %v197
    %v384 = vpack.c.b16 %v321, %v320
    %v385 = vpack.c.b16 %v323, %v322
    %v386 = vpack.c.b16 %v325, %v324
    %v387 = vpack.c.b16 %v327, %v326
    %v388 = vpack.c.b16 %v329, %v328
    %v389 = vpack.c.b16 %v331, %v330
    %v390 = vpack.c.b16 %v333, %v332
    %v391 = vpack.c.b16 %v335, %v334
    %v392 = vpack.c.b16 %v337, %v336
    %v393 = vpack.c.b16 %v339, %v338
    %v394 = vpack.c.b16 %v341, %v340
    %v395 = vpack.c.b16 %v343, %v342
    %v396 = vpack.c.b16 %v345, %v344
    %v397 = vpack.c.b16 %v347, %v346
    %v398 = vpack.c.b16 %v349, %v348
    %v399 = vpack.c.b16 %v351, %v350
    %v400 = vpack.c.b16 %v353, %v352
    %v401 = vpack.c.b16 %v355, %v354
    %v402 = vpack.c.b16 %v357, %v356
    %v403 = vpack.c.b16 %v359, %v358
    %v404 = vpack.c.b16 %v361, %v360
    %v405 = vpack.c.b16 %v363, %v362
    %v406 = vpack.c.b16 %v365, %v364
    %v407 = vpack.c.b16 %v367, %v366
    %v408 = vpack.c.b16 %v369, %v368
    %v409 = vpack.c.b16 %v371, %v370
    %v410 = vpack.c.b16 %v373, %v372
    %v411 = vpack.c.b16 %v375, %v374
    %v412 = vpack.c.b16 %v377, %v376
    %v413 = vpack.c.b16 %v379, %v378
    %v414 = vpack.c.b16 %v381, %v380
    %v415 = vpack.c.b16 %v383, %v382
    %448 = vmatpush.bf16.xpose.msra.mxu0 %v391
    %449 = vmatpush.bf16.xpose.msra.mxu0 %v390
    %450 = vmatpush.bf16.xpose.msra.mxu0 %v389
    %451 = vmatpush.bf16.xpose.msra.mxu0 %v388
    %452 = vmatpush.bf16.xpose.msra.mxu0 %v387
    %453 = vmatpush.bf16.xpose.msra.mxu0 %v386
    %454 = vmatpush.bf16.xpose.msra.mxu0 %v385
    %455 = vmatpush.bf16.xpose.msra.mxu0 %v384
    %456 = vmatmul.bf16.gmra.mxu0 %v240
    %v457 = vpop.f32.mrf.mxu0
    %v458 = vadd.f32 %v200, %v457
    %v459 = vpop.f32.mrf.mxu0
    %v460 = vadd.f32 %v200, %v459
    %461 = vmatmul.bf16.gmra.mxu0 %v241
    %v462 = vpop.f32.mrf.mxu0
    %v463 = vadd.f32 %v200, %v462
    %v464 = vpop.f32.mrf.mxu0
    %v465 = vadd.f32 %v200, %v464
    %466 = vmatmul.bf16.gmra.mxu0 %v242
    %v467 = vpop.f32.mrf.mxu0
    %v468 = vadd.f32 %v200, %v467
    %v469 = vpop.f32.mrf.mxu0
    %v470 = vadd.f32 %v200, %v469
    %471 = vmatmul.bf16.gmra.mxu0 %v243
    %v472 = vpop.f32.mrf.mxu0
    %v473 = vadd.f32 %v200, %v472
    %v474 = vpop.f32.mrf.mxu0
    %v475 = vadd.f32 %v200, %v474
    %476 = vmatmul.bf16.gmra.mxu0 %v244
    %v477 = vpop.f32.mrf.mxu0
    %v478 = vadd.f32 %v200, %v477
    %v479 = vpop.f32.mrf.mxu0
    %v480 = vadd.f32 %v200, %v479
    %481 = vmatmul.bf16.gmra.mxu0 %v245
    %v482 = vpop.f32.mrf.mxu0
    %v483 = vadd.f32 %v200, %v482
    %v484 = vpop.f32.mrf.mxu0
    %v485 = vadd.f32 %v200, %v484
    %486 = vmatmul.bf16.gmra.mxu0 %v246
    %v487 = vpop.f32.mrf.mxu0
    %v488 = vadd.f32 %v200, %v487
    %v489 = vpop.f32.mrf.mxu0
    %v490 = vadd.f32 %v200, %v489
    %491 = vmatmul.bf16.gmra.mxu0 %v247
    %v492 = vpop.f32.mrf.mxu0
    %v493 = vadd.f32 %v200, %v492
    %v494 = vpop.f32.mrf.mxu0
    %v495 = vadd.f32 %v200, %v494
    %496 = vdwg.mxu0
    %497 = vmatpush.bf16.xpose.msra.mxu0 %v399
    %498 = vmatpush.bf16.xpose.msra.mxu0 %v398
    %499 = vmatpush.bf16.xpose.msra.mxu0 %v397
    %500 = vmatpush.bf16.xpose.msra.mxu0 %v396
    %501 = vmatpush.bf16.xpose.msra.mxu0 %v395
    %502 = vmatpush.bf16.xpose.msra.mxu0 %v394
    %503 = vmatpush.bf16.xpose.msra.mxu0 %v393
    %504 = vmatpush.bf16.xpose.msra.mxu0 %v392
    %505 = vmatmul.bf16.gmra.mxu0 %v240
    %v506 = vpop.f32.mrf.mxu0
    %v507 = vadd.f32 %v201, %v506
    %v508 = vpop.f32.mrf.mxu0
    %v509 = vadd.f32 %v201, %v508
    %510 = vmatmul.bf16.gmra.mxu0 %v241
    %v511 = vpop.f32.mrf.mxu0
    %v512 = vadd.f32 %v201, %v511
    %v513 = vpop.f32.mrf.mxu0
    %v514 = vadd.f32 %v201, %v513
    %515 = vmatmul.bf16.gmra.mxu0 %v242
    %v516 = vpop.f32.mrf.mxu0
    %v517 = vadd.f32 %v201, %v516
    %v518 = vpop.f32.mrf.mxu0
    %v519 = vadd.f32 %v201, %v518
    %520 = vmatmul.bf16.gmra.mxu0 %v243
    %v521 = vpop.f32.mrf.mxu0
    %v522 = vadd.f32 %v201, %v521
    %v523 = vpop.f32.mrf.mxu0
    %v524 = vadd.f32 %v201, %v523
    %525 = vmatmul.bf16.gmra.mxu0 %v244
    %v526 = vpop.f32.mrf.mxu0
    %v527 = vadd.f32 %v201, %v526
    %v528 = vpop.f32.mrf.mxu0
    %v529 = vadd.f32 %v201, %v528
    %530 = vmatmul.bf16.gmra.mxu0 %v245
    %v531 = vpop.f32.mrf.mxu0
    %v532 = vadd.f32 %v201, %v531
    %v533 = vpop.f32.mrf.mxu0
    %v534 = vadd.f32 %v201, %v533
    %535 = vmatmul.bf16.gmra.mxu0 %v246
    %v536 = vpop.f32.mrf.mxu0
    %v537 = vadd.f32 %v201, %v536
    %v538 = vpop.f32.mrf.mxu0
    %v539 = vadd.f32 %v201, %v538
    %540 = vmatmul.bf16.gmra.mxu0 %v247
    %v541 = vpop.f32.mrf.mxu0
    %v542 = vadd.f32 %v201, %v541
    %v543 = vpop.f32.mrf.mxu0
    %v544 = vadd.f32 %v201, %v543
    %545 = vdwg.mxu0
    %546 = vmatpush.bf16.xpose.msra.mxu0 %v407
    %547 = vmatpush.bf16.xpose.msra.mxu0 %v406
    %548 = vmatpush.bf16.xpose.msra.mxu0 %v405
    %549 = vmatpush.bf16.xpose.msra.mxu0 %v404
    %550 = vmatpush.bf16.xpose.msra.mxu0 %v403
    %551 = vmatpush.bf16.xpose.msra.mxu0 %v402
    %552 = vmatpush.bf16.xpose.msra.mxu0 %v401
    %553 = vmatpush.bf16.xpose.msra.mxu0 %v400
    %554 = vmatmul.bf16.gmra.mxu0 %v240
    %v555 = vpop.f32.mrf.mxu0
    %v556 = vadd.f32 %v202, %v555
    %v557 = vpop.f32.mrf.mxu0
    %v558 = vadd.f32 %v202, %v557
    %559 = vmatmul.bf16.gmra.mxu0 %v241
    %v560 = vpop.f32.mrf.mxu0
    %v561 = vadd.f32 %v202, %v560
    %v562 = vpop.f32.mrf.mxu0
    %v563 = vadd.f32 %v202, %v562
    %564 = vmatmul.bf16.gmra.mxu0 %v242
    %v565 = vpop.f32.mrf.mxu0
    %v566 = vadd.f32 %v202, %v565
    %v567 = vpop.f32.mrf.mxu0
    %v568 = vadd.f32 %v202, %v567
    %569 = vmatmul.bf16.gmra.mxu0 %v243
    %v570 = vpop.f32.mrf.mxu0
    %v571 = vadd.f32 %v202, %v570
    %v572 = vpop.f32.mrf.mxu0
    %v573 = vadd.f32 %v202, %v572
    %574 = vmatmul.bf16.gmra.mxu0 %v244
    %v575 = vpop.f32.mrf.mxu0
    %v576 = vadd.f32 %v202, %v575
    %v577 = vpop.f32.mrf.mxu0
    %v578 = vadd.f32 %v202, %v577
    %579 = vmatmul.bf16.gmra.mxu0 %v245
    %v580 = vpop.f32.mrf.mxu0
    %v581 = vadd.f32 %v202, %v580
    %v582 = vpop.f32.mrf.mxu0
    %v583 = vadd.f32 %v202, %v582
    %584 = vmatmul.bf16.gmra.mxu0 %v246
    %v585 = vpop.f32.mrf.mxu0
    %v586 = vadd.f32 %v202, %v585
    %v587 = vpop.f32.mrf.mxu0
    %v588 = vadd.f32 %v202, %v587
    %589 = vmatmul.bf16.gmra.mxu0 %v247
    %v590 = vpop.f32.mrf.mxu0
    %v591 = vadd.f32 %v202, %v590
    %v592 = vpop.f32.mrf.mxu0
    %v593 = vadd.f32 %v202, %v592
    %594 = vdwg.mxu0
    %595 = vmatpush.bf16.xpose.msra.mxu0 %v415
    %596 = vmatpush.bf16.xpose.msra.mxu0 %v414
    %597 = vmatpush.bf16.xpose.msra.mxu0 %v413
    %598 = vmatpush.bf16.xpose.msra.mxu0 %v412
    %599 = vmatpush.bf16.xpose.msra.mxu0 %v411
    %600 = vmatpush.bf16.xpose.msra.mxu0 %v410
    %601 = vmatpush.bf16.xpose.msra.mxu0 %v409
    %602 = vmatpush.bf16.xpose.msra.mxu0 %v408
    %603 = vmatmul.bf16.gmra.mxu0 %v240
    %v604 = vpop.f32.mrf.mxu0
    %v605 = vadd.f32 %v203, %v604
    %v606 = vpop.f32.mrf.mxu0
    %v607 = vadd.f32 %v203, %v606
    %608 = vmatmul.bf16.gmra.mxu0 %v241
    %v609 = vpop.f32.mrf.mxu0
    %v610 = vadd.f32 %v203, %v609
    %v611 = vpop.f32.mrf.mxu0
    %v612 = vadd.f32 %v203, %v611
    %613 = vmatmul.bf16.gmra.mxu0 %v242
    %v614 = vpop.f32.mrf.mxu0
    %v615 = vadd.f32 %v203, %v614
    %v616 = vpop.f32.mrf.mxu0
    %v617 = vadd.f32 %v203, %v616
    %618 = vmatmul.bf16.gmra.mxu0 %v243
    %v619 = vpop.f32.mrf.mxu0
    %v620 = vadd.f32 %v203, %v619
    %v621 = vpop.f32.mrf.mxu0
    %v622 = vadd.f32 %v203, %v621
    %623 = vmatmul.bf16.gmra.mxu0 %v244
    %v624 = vpop.f32.mrf.mxu0
    %v625 = vadd.f32 %v203, %v624
    %v626 = vpop.f32.mrf.mxu0
    %v627 = vadd.f32 %v203, %v626
    %628 = vmatmul.bf16.gmra.mxu0 %v245
    %v629 = vpop.f32.mrf.mxu0
    %v630 = vadd.f32 %v203, %v629
    %v631 = vpop.f32.mrf.mxu0
    %v632 = vadd.f32 %v203, %v631
    %633 = vmatmul.bf16.gmra.mxu0 %v246
    %v634 = vpop.f32.mrf.mxu0
    %v635 = vadd.f32 %v203, %v634
    %v636 = vpop.f32.mrf.mxu0
    %v637 = vadd.f32 %v203, %v636
    %638 = vmatmul.bf16.gmra.mxu0 %v247
    %v639 = vpop.f32.mrf.mxu0
    %v640 = vadd.f32 %v203, %v639
    %v641 = vpop.f32.mrf.mxu0
    %v642 = vadd.f32 %v203, %v641
    %643 = vdwg.mxu0
    %644 = vst [vmem:[#allocation4] sm:$0xff] %v458
    %645 = vst [vmem:[#allocation4 + $0x8] sm:$0xff] %v507
    %646 = vst [vmem:[#allocation4 + $0x10] sm:$0xff] %v556
    %647 = vst [vmem:[#allocation4 + $0x18] sm:$0xff] %v605
    %648 = vst [vmem:[#allocation4 + $0x20] sm:$0xff] %v460
    %649 = vst [vmem:[#allocation4 + $0x28] sm:$0xff] %v509
    %650 = vst [vmem:[#allocation4 + $0x30] sm:$0xff] %v558
    %651 = vst [vmem:[#allocation4 + $0x38] sm:$0xff] %v607
    %652 = vst [vmem:[#allocation4 + $0x40] sm:$0xff] %v463
    %653 = vst [vmem:[#allocation4 + $0x48] sm:$0xff] %v512
    %654 = vst [vmem:[#allocation4 + $0x50] sm:$0xff] %v561
    %655 = vst [vmem:[#allocation4 + $0x58] sm:$0xff] %v610
    %656 = vst [vmem:[#allocation4 + $0x60] sm:$0xff] %v465
    %657 = vst [vmem:[#allocation4 + $0x68] sm:$0xff] %v514
    %658 = vst [vmem:[#allocation4 + $0x70] sm:$0xff] %v563
    %659 = vst [vmem:[#allocation4 + $0x78] sm:$0xff] %v612
    %660 = vst [vmem:[#allocation4 + $0x80] sm:$0xff] %v468
    %661 = vst [vmem:[#allocation4 + $0x88] sm:$0xff] %v517
    %662 = vst [vmem:[#allocation4 + $0x90] sm:$0xff] %v566
    %663 = vst [vmem:[#allocation4 + $0x98] sm:$0xff] %v615
    %664 = vst [vmem:[#allocation4 + $0xa0] sm:$0xff] %v470
    %665 = vst [vmem:[#allocation4 + $0xa8] sm:$0xff] %v519
    %666 = vst [vmem:[#allocation4 + $0xb0] sm:$0xff] %v568
    %667 = vst [vmem:[#allocation4 + $0xb8] sm:$0xff] %v617
    %668 = vst [vmem:[#allocation4 + $0xc0] sm:$0xff] %v473
    %669 = vst [vmem:[#allocation4 + $0xc8] sm:$0xff] %v522
    %670 = vst [vmem:[#allocation4 + $0xd0] sm:$0xff] %v571
    %671 = vst [vmem:[#allocation4 + $0xd8] sm:$0xff] %v620
    %672 = vst [vmem:[#allocation4 + $0xe0] sm:$0xff] %v475
    %673 = vst [vmem:[#allocation4 + $0xe8] sm:$0xff] %v524
    %674 = vst [vmem:[#allocation4 + $0xf0] sm:$0xff] %v573
    %675 = vst [vmem:[#allocation4 + $0xf8] sm:$0xff] %v622
    %676 = vst [vmem:[#allocation4 + $0x100] sm:$0xff] %v478
    %677 = vst [vmem:[#allocation4 + $0x108] sm:$0xff] %v527
    %678 = vst [vmem:[#allocation4 + $0x110] sm:$0xff] %v576
    %679 = vst [vmem:[#allocation4 + $0x118] sm:$0xff] %v625
    %680 = vst [vmem:[#allocation4 + $0x120] sm:$0xff] %v480
    %681 = vst [vmem:[#allocation4 + $0x128] sm:$0xff] %v529
    %682 = vst [vmem:[#allocation4 + $0x130] sm:$0xff] %v578
    %683 = vst [vmem:[#allocation4 + $0x138] sm:$0xff] %v627
    %684 = vst [vmem:[#allocation4 + $0x140] sm:$0xff] %v483
    %685 = vst [vmem:[#allocation4 + $0x148] sm:$0xff] %v532
    %686 = vst [vmem:[#allocation4 + $0x150] sm:$0xff] %v581
    %687 = vst [vmem:[#allocation4 + $0x158] sm:$0xff] %v630
    %688 = vst [vmem:[#allocation4 + $0x160] sm:$0xff] %v485
    %689 = vst [vmem:[#allocation4 + $0x168] sm:$0xff] %v534
    %690 = vst [vmem:[#allocation4 + $0x170] sm:$0xff] %v583
    %691 = vst [vmem:[#allocation4 + $0x178] sm:$0xff] %v632
    %692 = vst [vmem:[#allocation4 + $0x180] sm:$0xff] %v488
    %693 = vst [vmem:[#allocation4 + $0x188] sm:$0xff] %v537
    %694 = vst [vmem:[#allocation4 + $0x190] sm:$0xff] %v586
    %695 = vst [vmem:[#allocation4 + $0x198] sm:$0xff] %v635
    %696 = vst [vmem:[#allocation4 + $0x1a0] sm:$0xff] %v490
    %697 = vst [vmem:[#allocation4 + $0x1a8] sm:$0xff] %v539
    %698 = vst [vmem:[#allocation4 + $0x1b0] sm:$0xff] %v588
    %699 = vst [vmem:[#allocation4 + $0x1b8] sm:$0xff] %v637
    %700 = vst [vmem:[#allocation4 + $0x1c0] sm:$0xff] %v493
    %701 = vst [vmem:[#allocation4 + $0x1c8] sm:$0xff] %v542
    %702 = vst [vmem:[#allocation4 + $0x1d0] sm:$0xff] %v591
    %703 = vst [vmem:[#allocation4 + $0x1d8] sm:$0xff] %v640
    %704 = vst [vmem:[#allocation4 + $0x1e0] sm:$0xff] %v495
    %705 = vst [vmem:[#allocation4 + $0x1e8] sm:$0xff] %v544
    %706 = vst [vmem:[#allocation4 + $0x1f0] sm:$0xff] %v593
    %707 = vst [vmem:[#allocation4 + $0x1f8] sm:$0xff] %v642
    %s708 = smul.u32 0, 8
    %s709 = ssub.s32 8, %s708
    %p710 = scmp.lt.s32.totalorder %s709, 8
    %s711 = scalar_select %p710, %s709, 8
    // While loop
    $region50: #{tpu_custom_call.1} parent=1 // loop_pre_header
      _
    $region51: #{tpu_custom_call.1} parent=1 // loop_header
      %s713 = sphi 0, %s715
      %p714 = scmp.ge.s32.totalorder %s713, %s711
    $region52: #{tpu_custom_call.1} parent=1 // loop_header_branch
      %717 = sbr.rel (%p714) target = $region56
    $region53: #{tpu_custom_call.1} parent=1 // loop_body
      %v718 = vld [vmem:[#allocation2] sm:$0xff]
      %v719 = vld [vmem:[#allocation2 + $0x8] sm:$0xff]
      %s720 = smul.u32 %s713, 16
      %s721 = sshra.s32 %s720, 3
      %s722 = sand.u32 %s720, 7
      %s723 = smul.u32 %s721, 4
      %s724 = smul.addr %s723, 8
      %s725 = scalar_lea.vmem [#allocation4], %s724
      %v726 = vld [vmem:[%s725] sm:$0xff]
      %v727 = vld [vmem:[%s725 + $0x8] sm:$0xff]
      %v728 = vld [vmem:[%s725 + $0x10] sm:$0xff]
      %v729 = vld [vmem:[%s725 + $0x18] sm:$0xff]
      %v730 = vld [vmem:[%s725 + $0x20] sm:$0xff]
      %v731 = vld [vmem:[%s725 + $0x28] sm:$0xff]
      %v732 = vld [vmem:[%s725 + $0x30] sm:$0xff]
      %v733 = vld [vmem:[%s725 + $0x38] sm:$0xff]
      %v734 = vpack.c.bf16 %v719, %v718
      %v735 = vld [vmem:[#allocation13] sm:$0xf]
      %v736 = vld [vmem:[#allocation13 + $0x4] sm:$0xf]
      %v737 = vld [vmem:[#allocation13 + $0x8] sm:$0xf]
      %v738 = vld [vmem:[#allocation13 + $0xc] sm:$0xf]
      %v739 = vld [vmem:[#allocation13 + $0x10] sm:$0xf]
      %v740 = vld [vmem:[#allocation13 + $0x14] sm:$0xf]
      %v741 = vld [vmem:[#allocation13 + $0x18] sm:$0xf]
      %v742 = vld [vmem:[#allocation13 + $0x1c] sm:$0xf]
      %v743 = vld [vmem:[#allocation13 + $0x20] sm:$0xf]
      %v744 = vld [vmem:[#allocation13 + $0x24] sm:$0xf]
      %v745 = vld [vmem:[#allocation13 + $0x28] sm:$0xf]
      %v746 = vld [vmem:[#allocation13 + $0x2c] sm:$0xf]
      %v747 = vld [vmem:[#allocation13 + $0x30] sm:$0xf]
      %v748 = vld [vmem:[#allocation13 + $0x34] sm:$0xf]
      %v749 = vld [vmem:[#allocation13 + $0x38] sm:$0xf]
      %v750 = vld [vmem:[#allocation13 + $0x3c] sm:$0xf]
      %v751 = vld [vmem:[#allocation13 + $0x40] sm:$0xf]
      %v752 = vld [vmem:[#allocation13 + $0x44] sm:$0xf]
      %v753 = vld [vmem:[#allocation13 + $0x48] sm:$0xf]
      %v754 = vld [vmem:[#allocation13 + $0x4c] sm:$0xf]
      %v755 = vld [vmem:[#allocation13 + $0x50] sm:$0xf]
      %v756 = vld [vmem:[#allocation13 + $0x54] sm:$0xf]
      %v757 = vld [vmem:[#allocation13 + $0x58] sm:$0xf]
      %v758 = vld [vmem:[#allocation13 + $0x5c] sm:$0xf]
      %v759 = vld [vmem:[#allocation13 + $0x60] sm:$0xf]
      %v760 = vld [vmem:[#allocation13 + $0x64] sm:$0xf]
      %v761 = vld [vmem:[#allocation13 + $0x68] sm:$0xf]
      %v762 = vld [vmem:[#allocation13 + $0x6c] sm:$0xf]
      %v763 = vld [vmem:[#allocation13 + $0x70] sm:$0xf]
      %v764 = vld [vmem:[#allocation13 + $0x74] sm:$0xf]
      %v765 = vld [vmem:[#allocation13 + $0x78] sm:$0xf]
      %v766 = vld [vmem:[#allocation13 + $0x7c] sm:$0xf]
      %v767 = vld [vmem:[#allocation13 + $0x80] sm:$0xf]
      %v768 = vld [vmem:[#allocation13 + $0x84] sm:$0xf]
      %v769 = vld [vmem:[#allocation13 + $0x88] sm:$0xf]
      %v770 = vld [vmem:[#allocation13 + $0x8c] sm:$0xf]
      %v771 = vld [vmem:[#allocation13 + $0x90] sm:$0xf]
      %v772 = vld [vmem:[#allocation13 + $0x94] sm:$0xf]
      %v773 = vld [vmem:[#allocation13 + $0x98] sm:$0xf]
      %v774 = vld [vmem:[#allocation13 + $0x9c] sm:$0xf]
      %v775 = vld [vmem:[#allocation13 + $0xa0] sm:$0xf]
      %v776 = vld [vmem:[#allocation13 + $0xa4] sm:$0xf]
      %v777 = vld [vmem:[#allocation13 + $0xa8] sm:$0xf]
      %v778 = vld [vmem:[#allocation13 + $0xac] sm:$0xf]
      %v779 = vld [vmem:[#allocation13 + $0xb0] sm:$0xf]
      %v780 = vld [vmem:[#allocation13 + $0xb4] sm:$0xf]
      %v781 = vld [vmem:[#allocation13 + $0xb8] sm:$0xf]
      %v782 = vld [vmem:[#allocation13 + $0xbc] sm:$0xf]
      %v783 = vld [vmem:[#allocation13 + $0xc0] sm:$0xf]
      %v784 = vld [vmem:[#allocation13 + $0xc4] sm:$0xf]
      %v785 = vld [vmem:[#allocation13 + $0xc8] sm:$0xf]
      %v786 = vld [vmem:[#allocation13 + $0xcc] sm:$0xf]
      %v787 = vld [vmem:[#allocation13 + $0xd0] sm:$0xf]
      %v788 = vld [vmem:[#allocation13 + $0xd4] sm:$0xf]
      %v789 = vld [vmem:[#allocation13 + $0xd8] sm:$0xf]
      %v790 = vld [vmem:[#allocation13 + $0xdc] sm:$0xf]
      %v791 = vld [vmem:[#allocation13 + $0xe0] sm:$0xf]
      %v792 = vld [vmem:[#allocation13 + $0xe4] sm:$0xf]
      %v793 = vld [vmem:[#allocation13 + $0xe8] sm:$0xf]
      %v794 = vld [vmem:[#allocation13 + $0xec] sm:$0xf]
      %v795 = vld [vmem:[#allocation13 + $0xf0] sm:$0xf]
      %v796 = vld [vmem:[#allocation13 + $0xf4] sm:$0xf]
      %v797 = vld [vmem:[#allocation13 + $0xf8] sm:$0xf]
      %v798 = vld [vmem:[#allocation13 + $0xfc] sm:$0xf]
      %v863 = vunpack.c.l.b16 %v735
      %v864 = vunpack.c.l.b16 %v736
      %v865 = vunpack.c.l.b16 %v737
      %v866 = vunpack.c.l.b16 %v738
      %v867 = vunpack.c.l.b16 %v739
      %v868 = vunpack.c.l.b16 %v740
      %v869 = vunpack.c.l.b16 %v741
      %v870 = vunpack.c.l.b16 %v742
      %v871 = vunpack.c.l.b16 %v743
      %v872 = vunpack.c.l.b16 %v744
      %v873 = vunpack.c.l.b16 %v745
      %v874 = vunpack.c.l.b16 %v746
      %v875 = vunpack.c.l.b16 %v747
      %v876 = vunpack.c.l.b16 %v748
      %v877 = vunpack.c.l.b16 %v749
      %v878 = vunpack.c.l.b16 %v750
      %v879 = vunpack.c.l.b16 %v751
      %v880 = vunpack.c.l.b16 %v752
      %v881 = vunpack.c.l.b16 %v753
      %v882 = vunpack.c.l.b16 %v754
      %v883 = vunpack.c.l.b16 %v755
      %v884 = vunpack.c.l.b16 %v756
      %v885 = vunpack.c.l.b16 %v757
      %v886 = vunpack.c.l.b16 %v758
      %v887 = vunpack.c.l.b16 %v759
      %v888 = vunpack.c.l.b16 %v760
      %v889 = vunpack.c.l.b16 %v761
      %v890 = vunpack.c.l.b16 %v762
      %v891 = vunpack.c.l.b16 %v763
      %v892 = vunpack.c.l.b16 %v764
      %v893 = vunpack.c.l.b16 %v765
      %v894 = vunpack.c.l.b16 %v766
      %v895 = vunpack.c.l.b16 %v767
      %v896 = vunpack.c.l.b16 %v768
      %v897 = vunpack.c.l.b16 %v769
      %v898 = vunpack.c.l.b16 %v770
      %v899 = vunpack.c.l.b16 %v771
      %v900 = vunpack.c.l.b16 %v772
      %v901 = vunpack.c.l.b16 %v773
      %v902 = vunpack.c.l.b16 %v774
      %v903 = vunpack.c.l.b16 %v775
      %v904 = vunpack.c.l.b16 %v776
      %v905 = vunpack.c.l.b16 %v777
      %v906 = vunpack.c.l.b16 %v778
      %v907 = vunpack.c.l.b16 %v779
      %v908 = vunpack.c.l.b16 %v780
      %v909 = vunpack.c.l.b16 %v781
      %v910 = vunpack.c.l.b16 %v782
      %v911 = vunpack.c.l.b16 %v783
      %v912 = vunpack.c.l.b16 %v784
      %v913 = vunpack.c.l.b16 %v785
      %v914 = vunpack.c.l.b16 %v786
      %v915 = vunpack.c.l.b16 %v787
      %v916 = vunpack.c.l.b16 %v788
      %v917 = vunpack.c.l.b16 %v789
      %v918 = vunpack.c.l.b16 %v790
      %v919 = vunpack.c.l.b16 %v791
      %v920 = vunpack.c.l.b16 %v792
      %v921 = vunpack.c.l.b16 %v793
      %v922 = vunpack.c.l.b16 %v794
      %v923 = vunpack.c.l.b16 %v795
      %v924 = vunpack.c.l.b16 %v796
      %v925 = vunpack.c.l.b16 %v797
      %v926 = vunpack.c.l.b16 %v798
      %v927 = vpack.c.b16 %v864, %v863
      %v928 = vpack.c.b16 %v866, %v865
      %v929 = vpack.c.b16 %v868, %v867
      %v930 = vpack.c.b16 %v870, %v869
      %v931 = vpack.c.b16 %v872, %v871
      %v932 = vpack.c.b16 %v874, %v873
      %v933 = vpack.c.b16 %v876, %v875
      %v934 = vpack.c.b16 %v878, %v877
      %v935 = vpack.c.b16 %v880, %v879
      %v936 = vpack.c.b16 %v882, %v881
      %v937 = vpack.c.b16 %v884, %v883
      %v938 = vpack.c.b16 %v886, %v885
      %v939 = vpack.c.b16 %v888, %v887
      %v940 = vpack.c.b16 %v890, %v889
      %v941 = vpack.c.b16 %v892, %v891
      %v942 = vpack.c.b16 %v894, %v893
      %v943 = vpack.c.b16 %v896, %v895
      %v944 = vpack.c.b16 %v898, %v897
      %v945 = vpack.c.b16 %v900, %v899
      %v946 = vpack.c.b16 %v902, %v901
      %v947 = vpack.c.b16 %v904, %v903
      %v948 = vpack.c.b16 %v906, %v905
      %v949 = vpack.c.b16 %v908, %v907
      %v950 = vpack.c.b16 %v910, %v909
      %v951 = vpack.c.b16 %v912, %v911
      %v952 = vpack.c.b16 %v914, %v913
      %v953 = vpack.c.b16 %v916, %v915
      %v954 = vpack.c.b16 %v918, %v917
      %v955 = vpack.c.b16 %v920, %v919
      %v956 = vpack.c.b16 %v922, %v921
      %v957 = vpack.c.b16 %v924, %v923
      %v958 = vpack.c.b16 %v926, %v925
      %991 = vmatpush.bf16.xpose.msra.mxu0 %v934
      %992 = vmatpush.bf16.xpose.msra.mxu0 %v933
      %993 = vmatpush.bf16.xpose.msra.mxu0 %v932
      %994 = vmatpush.bf16.xpose.msra.mxu0 %v931
      %995 = vmatpush.bf16.xpose.msra.mxu0 %v930
      %996 = vmatpush.bf16.xpose.msra.mxu0 %v929
      %997 = vmatpush.bf16.xpose.msra.mxu0 %v928
      %998 = vmatpush.bf16.xpose.msra.mxu0 %v927
      %999 = vmatmul.bf16.gmra.mxu0 %v734
      %v1000 = vpop.f32.mrf.mxu0
      %v1001 = vadd.f32 0.0, %v1000
      %v1002 = vpop.f32.mrf.mxu0
      %v1003 = vadd.f32 0.0, %v1002
      %1004 = vdwg.mxu0
      %1005 = vmatpush.bf16.xpose.msra.mxu0 %v942
      %1006 = vmatpush.bf16.xpose.msra.mxu0 %v941
      %1007 = vmatpush.bf16.xpose.msra.mxu0 %v940
      %1008 = vmatpush.bf16.xpose.msra.mxu0 %v939
      %1009 = vmatpush.bf16.xpose.msra.mxu0 %v938
      %1010 = vmatpush.bf16.xpose.msra.mxu0 %v937
      %1011 = vmatpush.bf16.xpose.msra.mxu0 %v936
      %1012 = vmatpush.bf16.xpose.msra.mxu0 %v935
      %1013 = vmatmul.bf16.gmra.mxu0 %v734
      %v1014 = vpop.f32.mrf.mxu0
      %v1015 = vadd.f32 0.0, %v1014
      %v1016 = vpop.f32.mrf.mxu0
      %v1017 = vadd.f32 0.0, %v1016
      %1018 = vdwg.mxu0
      %1019 = vmatpush.bf16.xpose.msra.mxu0 %v950
      %1020 = vmatpush.bf16.xpose.msra.mxu0 %v949
      %1021 = vmatpush.bf16.xpose.msra.mxu0 %v948
      %1022 = vmatpush.bf16.xpose.msra.mxu0 %v947
      %1023 = vmatpush.bf16.xpose.msra.mxu0 %v946
      %1024 = vmatpush.bf16.xpose.msra.mxu0 %v945
      %1025 = vmatpush.bf16.xpose.msra.mxu0 %v944
      %1026 = vmatpush.bf16.xpose.msra.mxu0 %v943
      %1027 = vmatmul.bf16.gmra.mxu0 %v734
      %v1028 = vpop.f32.mrf.mxu0
      %v1029 = vadd.f32 0.0, %v1028
      %v1030 = vpop.f32.mrf.mxu0
      %v1031 = vadd.f32 0.0, %v1030
      %1032 = vdwg.mxu0
      %1033 = vmatpush.bf16.xpose.msra.mxu0 %v958
      %1034 = vmatpush.bf16.xpose.msra.mxu0 %v957
      %1035 = vmatpush.bf16.xpose.msra.mxu0 %v956
      %1036 = vmatpush.bf16.xpose.msra.mxu0 %v955
      %1037 = vmatpush.bf16.xpose.msra.mxu0 %v954
      %1038 = vmatpush.bf16.xpose.msra.mxu0 %v953
      %1039 = vmatpush.bf16.xpose.msra.mxu0 %v952
      %1040 = vmatpush.bf16.xpose.msra.mxu0 %v951
      %1041 = vmatmul.bf16.gmra.mxu0 %v734
      %v1042 = vpop.f32.mrf.mxu0
      %v1043 = vadd.f32 0.0, %v1042
      %v1044 = vpop.f32.mrf.mxu0
      %v1045 = vadd.f32 0.0, %v1044
      %1046 = vdwg.mxu0
      %v1047 = vadd.f32 %v726, %v1001
      %v1048 = vadd.f32 %v727, %v1015
      %v1049 = vadd.f32 %v728, %v1029
      %v1050 = vadd.f32 %v729, %v1043
      %v1051 = vadd.f32 %v730, %v1003
      %v1052 = vadd.f32 %v731, %v1017
      %v1053 = vadd.f32 %v732, %v1031
      %v1054 = vadd.f32 %v733, %v1045
      %v1055 = vxor.u32 %v1047, 2147483648
      %v1056 = vxor.u32 %v1051, 2147483648
      %v1057 = vmul.f32 %v1055, 1.442695
      %v1058 = vpow.pop %v1057
      %v1059 = vmul.f32 %v1056, 1.442695
      %v1060 = vpow.pop %v1059
      %v1061 = vadd.f32 %v1058, 1.0
      %v1062 = vadd.f32 %v1060, 1.0
      %v1063 = vrcp.pop %v1061
      %v1064 = vmul.f32 %v1061, %v1063
      %v1065 = vsub.f32 1.0, %v1064
      %v1066 = vmul.f32 %v1063, %v1065
      %v1067 = vadd.f32 %v1063, %v1066
      %vm1068 = vweird.f32 %v1061
      %vm1069 = vweird.f32 %v1063
      %vm1070 = vmor %vm1068, %vm1069
      %v1071 = vsel %vm1070, %v1063, %v1067
      %v1072 = vand.u32 2147483647, %v1061
      %vm1073 = vcmp.eq.f32.partialorder %v1072, 8.507059e+37
      %v1074 = vand.u32 %v1061, 2147483648
      %v1075 = vor.u32 1.1754944e-38, %v1074
      %v1076 = vsel %vm1073, %v1075, %v1071
      %v1077 = vmul.f32 1.0, %v1076
      %v1078 = vrcp.pop %v1062
      %v1079 = vmul.f32 %v1062, %v1078
      %v1080 = vsub.f32 1.0, %v1079
      %v1081 = vmul.f32 %v1078, %v1080
      %v1082 = vadd.f32 %v1078, %v1081
      %vm1083 = vweird.f32 %v1062
      %vm1084 = vweird.f32 %v1078
      %vm1085 = vmor %vm1083, %vm1084
      %v1086 = vsel %vm1085, %v1078, %v1082
      %v1087 = vand.u32 2147483647, %v1062
      %vm1088 = vcmp.eq.f32.partialorder %v1087, 8.507059e+37
      %v1089 = vand.u32 %v1062, 2147483648
      %v1090 = vor.u32 1.1754944e-38, %v1089
      %v1091 = vsel %vm1088, %v1090, %v1086
      %v1092 = vmul.f32 1.0, %v1091
      %v1093 = vxor.u32 %v1048, 2147483648
      %v1094 = vxor.u32 %v1052, 2147483648
      %v1095 = vmul.f32 %v1093, 1.442695
      %v1096 = vpow.pop %v1095
      %v1097 = vmul.f32 %v1094, 1.442695
      %v1098 = vpow.pop %v1097
      %v1099 = vadd.f32 %v1096, 1.0
      %v1100 = vadd.f32 %v1098, 1.0
      %v1101 = vrcp.pop %v1099
      %v1102 = vmul.f32 %v1099, %v1101
      %v1103 = vsub.f32 1.0, %v1102
      %v1104 = vmul.f32 %v1101, %v1103
      %v1105 = vadd.f32 %v1101, %v1104
      %vm1106 = vweird.f32 %v1099
      %vm1107 = vweird.f32 %v1101
      %vm1108 = vmor %vm1106, %vm1107
      %v1109 = vsel %vm1108, %v1101, %v1105
      %v1110 = vand.u32 2147483647, %v1099
      %vm1111 = vcmp.eq.f32.partialorder %v1110, 8.507059e+37
      %v1112 = vand.u32 %v1099, 2147483648
      %v1113 = vor.u32 1.1754944e-38, %v1112
      %v1114 = vsel %vm1111, %v1113, %v1109
      %v1115 = vmul.f32 1.0, %v1114
      %v1116 = vrcp.pop %v1100
      %v1117 = vmul.f32 %v1100, %v1116
      %v1118 = vsub.f32 1.0, %v1117
      %v1119 = vmul.f32 %v1116, %v1118
      %v1120 = vadd.f32 %v1116, %v1119
      %vm1121 = vweird.f32 %v1100
      %vm1122 = vweird.f32 %v1116
      %vm1123 = vmor %vm1121, %vm1122
      %v1124 = vsel %vm1123, %v1116, %v1120
      %v1125 = vand.u32 2147483647, %v1100
      %vm1126 = vcmp.eq.f32.partialorder %v1125, 8.507059e+37
      %v1127 = vand.u32 %v1100, 2147483648
      %v1128 = vor.u32 1.1754944e-38, %v1127
      %v1129 = vsel %vm1126, %v1128, %v1124
      %v1130 = vmul.f32 1.0, %v1129
      %v1131 = vtanh.pop %v1049
      %v1132 = vtanh.pop %v1053
      %v1133 = vxor.u32 %v1050, 2147483648
      %v1134 = vxor.u32 %v1054, 2147483648
      %v1135 = vmul.f32 %v1133, 1.442695
      %v1136 = vpow.pop %v1135
      %v1137 = vmul.f32 %v1134, 1.442695
      %v1138 = vpow.pop %v1137
      %v1139 = vadd.f32 %v1136, 1.0
      %v1140 = vadd.f32 %v1138, 1.0
      %v1141 = vrcp.pop %v1139
      %v1142 = vmul.f32 %v1139, %v1141
      %v1143 = vsub.f32 1.0, %v1142
      %v1144 = vmul.f32 %v1141, %v1143
      %v1145 = vadd.f32 %v1141, %v1144
      %vm1146 = vweird.f32 %v1139
      %vm1147 = vweird.f32 %v1141
      %vm1148 = vmor %vm1146, %vm1147
      %v1149 = vsel %vm1148, %v1141, %v1145
      %v1150 = vand.u32 2147483647, %v1139
      %vm1151 = vcmp.eq.f32.partialorder %v1150, 8.507059e+37
      %v1152 = vand.u32 %v1139, 2147483648
      %v1153 = vor.u32 1.1754944e-38, %v1152
      %v1154 = vsel %vm1151, %v1153, %v1149
      %v1155 = vmul.f32 1.0, %v1154
      %v1156 = vrcp.pop %v1140
      %v1157 = vmul.f32 %v1140, %v1156
      %v1158 = vsub.f32 1.0, %v1157
      %v1159 = vmul.f32 %v1156, %v1158
      %v1160 = vadd.f32 %v1156, %v1159
      %vm1161 = vweird.f32 %v1140
      %vm1162 = vweird.f32 %v1156
      %vm1163 = vmor %vm1161, %vm1162
      %v1164 = vsel %vm1163, %v1156, %v1160
      %v1165 = vand.u32 2147483647, %v1140
      %vm1166 = vcmp.eq.f32.partialorder %v1165, 8.507059e+37
      %v1167 = vand.u32 %v1140, 2147483648
      %v1168 = vor.u32 1.1754944e-38, %v1167
      %v1169 = vsel %vm1166, %v1168, %v1164
      %v1170 = vmul.f32 1.0, %v1169
      %v1171 = vld [vmem:[#allocation3] sm:$0xff]
      %v1172 = vld [vmem:[#allocation3 + $0x8] sm:$0xff]
      %v1173 = vmul.f32 %v1115, %v1171
      %v1174 = vmul.f32 %v1130, %v1172
      %v1175 = vmul.f32 %v1077, %v1131
      %v1176 = vmul.f32 %v1092, %v1132
      %v1177 = vadd.f32 %v1173, %v1175
      %v1178 = vadd.f32 %v1174, %v1176
      %v1179 = vtanh.pop %v1177
      %v1180 = vtanh.pop %v1178
      %v1181 = vmul.f32 %v1155, %v1179
      %v1182 = vmul.f32 %v1170, %v1180
      %1183 = vst [vmem:[#allocation2] sm:$0xff] %v1181
      %1184 = vst [vmem:[#allocation2 + $0x8] sm:$0xff] %v1182
      %1185 = vst [vmem:[#allocation3] sm:$0xff] %v1177
      %1186 = vst [vmem:[#allocation3 + $0x8] sm:$0xff] %v1178
      %v1187 = vpack.c.bf16 %v1181, %v1181
      %v1188 = vpack.c.bf16 %v1182, %v1182
      %s1189 = smul.u32 %s713, 2
      %s1190 = smul.addr %s1189, 4
      %s1191 = scalar_lea.vmem [#allocation14], %s1190
      %1192 = vst [vmem:[%s1191] sm:$0xf] %v1187
      %1193 = vst [vmem:[%s1191 + $0x4] sm:$0xf] %v1188
    $region54: #{tpu_custom_call.1} parent=1 // loop_footer
      %s715 = sadd.s32 %s713, 1
    $region55: #{tpu_custom_call.1} parent=1 // loop_footer_branch
      %712 = sbr.rel target = $region51
    $region56: #{tpu_custom_call.1} parent=1 // loop_exit
      _
    %v1194 = vld [vmem:[#allocation2] sm:$0xff]
    %v1195 = vld [vmem:[#allocation2 + $0x8] sm:$0xff]
    %v1196 = vpack.c.bf16 %v1194, %v1194
    %v1197 = vpack.c.bf16 %v1195, %v1195
    // While loop
    $region57: #{tpu_custom_call.1} parent=1 // loop_pre_header
      _
    $region58: #{tpu_custom_call.1} parent=1 // loop_header
      %s1199 = sphi %s711, %s1201
      %p1200 = scmp.ge.s32.totalorder %s1199, 8
    $region59: #{tpu_custom_call.1} parent=1 // loop_header_branch
      %1203 = sbr.rel (%p1200) target = $region63
    $region60: #{tpu_custom_call.1} parent=1 // loop_body
      %s1204 = smul.u32 %s1199, 2
      %s1205 = smul.addr %s1204, 4
      %s1206 = scalar_lea.vmem [#allocation14], %s1205
      %1207 = vst [vmem:[%s1206] sm:$0xf] %v1196
      %1208 = vst [vmem:[%s1206 + $0x4] sm:$0xf] %v1197
    $region61: #{tpu_custom_call.1} parent=1 // loop_footer
      %s1201 = sadd.s32 %s1199, 1
    $region62: #{tpu_custom_call.1} parent=1 // loop_footer_branch
      %1198 = sbr.rel target = $region58
    $region63: #{tpu_custom_call.1} parent=1 // loop_exit
      _
    // Predicated region
    $region64: #{tpu_custom_call.1} parent=1 // pred_check
      %p1209 = pneg %p106
    $region65: #{tpu_custom_call.1} parent=1 // pred_check_branch
      %1211 = sbr.rel (%p1209) target = $region67
    $region66: #{tpu_custom_call.1} parent=1 // pred_region
      %v1212 = vld [vmem:[#allocation2] sm:$0xff]
      %v1213 = vld [vmem:[#allocation2 + $0x8] sm:$0xff]
      %1214 = vst [vmem:[#allocation15] sm:$0xff] %v1212
      %1215 = vst [vmem:[#allocation15 + $0x8] sm:$0xff] %v1213
      %v1216 = vld [vmem:[#allocation3] sm:$0xff]
      %v1217 = vld [vmem:[#allocation3 + $0x8] sm:$0xff]
      %1218 = vst [vmem:[#allocation17] sm:$0xff] %v1216
      %1219 = vst [vmem:[#allocation17 + $0x8] sm:$0xff] %v1217
    $region67: #{tpu_custom_call.1} parent=1 // pred_fallthru
      _
    // Predicated region
    $region68: #{tpu_custom_call.1} parent=1 // pred_check
      _
    $region69: #{tpu_custom_call.1} parent=1 // pred_check_branch
      %1221 = sbr.rel (0) target = $region71
    $region70: #{tpu_custom_call.1} parent=1 // pred_region
      %1223 = vsyncadd [#allocation7], 0
      %s1224 = sshll.u32 [#allocation14], 4
      %s1225 = int_to_ptr.vmem [resolvable:$true] %s1224
      %s1226 = sshll.u32 %s6, 4
      %s1227 = int_to_ptr.hbm [resolvable:$true] %s1226
      %1232 = dma.vmem_to_hbm [thread:$0]  %s1225, 1024, %s1227, [#allocation7], 64, 64, 4
    $region71: #{tpu_custom_call.1} parent=1 // pred_fallthru
      _
    // Predicated region
    $region72: #{tpu_custom_call.1} parent=1 // pred_check
      _
    $region73: #{tpu_custom_call.1} parent=1 // pred_check_branch
      %1234 = sbr.rel (0) target = $region75
    $region74: #{tpu_custom_call.1} parent=1 // pred_region
      %1236 = vsyncadd [#allocation16], 0
      %s1237 = sshll.u32 [#allocation15], 4
      %s1238 = int_to_ptr.vmem [resolvable:$true] %s1237
      %s1239 = sshll.u32 %s7, 4
      %s1240 = int_to_ptr.hbm [resolvable:$true] %s1239
      %1245 = dma.vmem_to_hbm [thread:$0]  %s1238, 256, %s1240, [#allocation16], 128, 128, 8
    $region75: #{tpu_custom_call.1} parent=1 // pred_fallthru
      _
    // Predicated region
    $region76: #{tpu_custom_call.1} parent=1 // pred_check
      _
    $region77: #{tpu_custom_call.1} parent=1 // pred_check_branch
      %1247 = sbr.rel (0) target = $region79
    $region78: #{tpu_custom_call.1} parent=1 // pred_region
      %1249 = vsyncadd [#allocation16], 0
      %s1250 = sshll.u32 [#allocation17], 4
      %s1251 = int_to_ptr.vmem [resolvable:$true] %s1250
      %s1252 = sshll.u32 %s8, 4
      %s1253 = int_to_ptr.hbm [resolvable:$true] %s1252
      %1258 = dma.vmem_to_hbm [thread:$0]  %s1251, 256, %s1253, [#allocation16], 128, 128, 8
    $region79: #{tpu_custom_call.1} parent=1 // pred_fallthru
      _
    // Predicated region
    $region80: #{tpu_custom_call.1} parent=1 // pred_check
      _
    $region81: #{tpu_custom_call.1} parent=1 // pred_check_branch
      %1260 = sbr.rel (0) target = $region83
    $region82: #{tpu_custom_call.1} parent=1 // pred_region
      %1262 = dma.done [#allocation7], 1024
    $region83: #{tpu_custom_call.1} parent=1 // pred_fallthru
      _
    // Predicated region
    $region84: #{tpu_custom_call.1} parent=1 // pred_check
      _
    $region85: #{tpu_custom_call.1} parent=1 // pred_check_branch
      %1264 = sbr.rel (0) target = $region87
    $region86: #{tpu_custom_call.1} parent=1 // pred_region
      %1266 = dma.done [#allocation16], 256
    $region87: #{tpu_custom_call.1} parent=1 // pred_fallthru
      _
    // Predicated region
    $region88: #{tpu_custom_call.1} parent=1 // pred_check
      _
    $region89: #{tpu_custom_call.1} parent=1 // pred_check_branch
      %1268 = sbr.rel (0) target = $region91
    $region90: #{tpu_custom_call.1} parent=1 // pred_region
      %1270 = dma.done [#allocation16], 256
    $region91: #{tpu_custom_call.1} parent=1 // pred_fallthru
      _
    %1271 = vsyncpa [#allocation6], 1
    %1272 = vsyncpa [#allocation9], 1
    %1273 = vsyncpa [#allocation12], 1
    %1274 = vsyncpa [#allocation7], 1
    %1275 = vsyncpa [#allocation16], 1

</llo_original>
